<compile_context>
chip_gen: v7x
topology: tpu7x:2x2x1
jax: 0.10.0
libtpu: 0.0.40
codegen_flags: <defaults>
</compile_context>

<pallas_src>
import jax
import jax.numpy as jnp
from jax.experimental import pallas as pl
from jax.experimental.pallas import tpu as pltpu


NEGATIVE_SLOPE = 0.1


def _leaky_relu_transpose_kernel(x_ref, o_ref):
    x = x_ref[...]
    y = jnp.where(x >= 0, x, NEGATIVE_SLOPE * x)   # single VPU select
    o_ref[...] = y.T                               # 2-D tile transpose (XLU)


def _choose_tile(dim, target):
    """Largest tile <= target that evenly divides `dim`, preferring
    multiples of 128 (lane-dense loads/stores). Falls back to the full dim
    for small arrays."""
    if dim <= target:
        return dim
    # Prefer multiples of 128 so both pre- and post-transpose tiles are
    # (8,128)-aligned and all stores are unmasked.
    t = (target // 128) * 128
    while t >= 128:
        if dim % t == 0:
            return t
        t -= 128
    # Fall back to any divisor <= target (correct, possibly slower).
    for t in range(target, 0, -1):
        if dim % t == 0:
            return t
    return dim


def leaky_relu_transpose(x, tm=512, tn=512):
    """Computes LeakyReLU(x, 0.1).T with a tiled Pallas kernel.

    x: f32[M, N]; returns f32[N, M].
    Tiles are chosen as the largest divisors of (M, N) not exceeding
    (tm, tn), preferring multiples of 128 on both axes.
    """
    M, N = x.shape
    tm = _choose_tile(M, tm)
    tn = _choose_tile(N, tn)
    assert M % tm == 0 and N % tn == 0, "shape must tile evenly"

    grid = (M // tm, N // tn)

    return pl.pallas_call(
        _leaky_relu_transpose_kernel,
        out_shape=jax.ShapeDtypeStruct((N, M), x.dtype),
        grid=grid,
        in_specs=[pl.BlockSpec((tm, tn), lambda i, j: (i, j))],
        out_specs=pl.BlockSpec((tn, tm), lambda i, j: (j, i)),
        compiler_params=pltpu.CompilerParams(
            dimension_semantics=("parallel", "parallel")
        ),
    )(x)


if __name__ == "__main__":
    key = jax.random.PRNGKey(0)
    # Small 2-D input (torch.t requires <= 2-D).  512x1024 keeps the test
    # small (2 MiB) while still exercising a multi-step grid (1 x 2) with
    # full 512x512 lane-dense tiles.
    x = jax.random.normal(key, (512, 1024), dtype=jnp.float32)

    out = leaky_relu_transpose(x)
    out = jax.block_until_ready(out)

    # Reference check in plain JAX.
    ref = jnp.where(x >= 0, x, NEGATIVE_SLOPE * x).T
    assert out.shape == (1024, 512)
    assert jnp.allclose(out, ref, atol=1e-6), "mismatch vs reference"

    print("KERNEL_OK")
</pallas_src>

<mosaic_0001>
module attributes {stable_mosaic.version = 11 : i64} {
  func.func @_leaky_relu_transpose_kernel(%arg0: i32, %arg1: i32, %arg2: memref<512x512xf32, #tpu.memory_space<vmem>>, %arg3: memref<512x512xf32, #tpu.memory_space<vmem>>) attributes {dimension_semantics = [#tpu.dimension_semantics<parallel>, #tpu.dimension_semantics<parallel>], iteration_bounds = array<i64: 1, 2>, scalar_prefetch = 0 : i64, scratch_operands = 0 : i64, tpu.core_type = #tpu.core_type<tc>, window_params = [{transform_indices = @transform_0, window_bounds = array<i64: 512, 512>}, {transform_indices = @transform_1, window_bounds = array<i64: 512, 512>}]} {
    %c0 = arith.constant 0 : index
    %c0_0 = arith.constant 0 : index
    %0 = vector.load %arg2[%c0, %c0_0] : memref<512x512xf32, #tpu.memory_space<vmem>>, vector<512x512xf32>
    %cst = arith.constant 0.000000e+00 : f32
    %1 = vector.broadcast %cst : f32 to vector<512x512xf32>
    %2 = arith.cmpf oge, %0, %1 : vector<512x512xf32>
    %cst_1 = arith.constant 1.000000e-01 : f32
    %3 = vector.broadcast %cst_1 : f32 to vector<512x512xf32>
    %4 = arith.mulf %3, %0 : vector<512x512xf32>
    %5 = arith.select %2, %0, %4 : vector<512x512xi1>, vector<512x512xf32>
    %6 = tpu.transpose %5, [1, 0] : vector<512x512xf32> -> vector<512x512xf32>
    %c0_2 = arith.constant 0 : index
    %c0_3 = arith.constant 0 : index
    %7 = vector.load %arg3[%c0_2, %c0_3] : memref<512x512xf32, #tpu.memory_space<vmem>>, vector<512x512xf32>
    tpu.vector_store %arg3[%c0_2, %c0_3], %6 {strides = array<i32>} : memref<512x512xf32, #tpu.memory_space<vmem>>, vector<512x512xf32>,
    return
  }
  func.func @transform_0(%arg0: i32, %arg1: i32) -> (i32, i32) {
    %c0_i32 = arith.constant 0 : i32
    return %arg0, %arg1 : i32, i32
  }
  func.func @transform_1(%arg0: i32, %arg1: i32) -> (i32, i32) {
    %c0_i32 = arith.constant 0 : i32
    return %arg1, %arg0 : i32, i32
  }
}

</mosaic_0001>

<llo_original>
// kernel: tpu_custom_call.1
$region0: #{tpu_custom_call.1}
  #allocation0 [shape = 'u32[]', space=smem, size = 0x4, offset = 0x4, fixed_abs, tag = 'smem constant byte address 0x4 - core index']
  #allocation1 [shape = 'u32[144,128]{1,0:T(1,128)}', space=vmem, size = 0x12000, scoped, tag = 'internal scratch']
  %s0 = inlined_call_operand.hbm [shape: f32[512,1024], index: 0, kind: input, shape index: {}]
  %s1 = inlined_call_operand.hbm [shape: f32[1024,512], index: 1, kind: output, shape index: {}]
  %s2 = sld [smem:[#allocation0]]
  $region41: #{tpu_custom_call.1} parent=0
    _
  %s4 = ssub.s32 1, %s2
  %s5 = scalar_select 0, %s4, %s2
  $region1: #{tpu_custom_call.1} parent=0
    #allocation2 [shape = 'u8[2097152]{0}', space=vmem, size = 0x200000, scoped, tag = 'input window, operand 0']
    #allocation3 [shape = 's32[2]{0}', space=sflag, size = 0x8, scoped, tag = 'scoped memory for tpu_custom_call.1']
    #allocation4 [shape = 's32[2]{0}', space=sflag, size = 0x8, scoped, tag = 'scoped memory for tpu_custom_call.1']
    #allocation5 [shape = 'u8[2097152]{0}', space=vmem, size = 0x200000, scoped, tag = 'output window, operand 0']
    %6 = vsyncpa [#allocation3], 0
    %s7 = scalar_lea.sflag [#allocation3], 1
    %8 = vsyncpa %s7, 0
    %9 = vsyncpa [#allocation4], 0
    %s10 = scalar_lea.sflag [#allocation4], 1
    %11 = vsyncpa %s10, 0
    loop: start=0, step=1, limit=4
    $region2: #{tpu_custom_call.1} parent=1 // loop_pre_header
      _
    $region3: #{tpu_custom_call.1} parent=1 // loop_header
      %s13 = sphi 0, %s17
      %p14 = scmp.ge.s32.totalorder %s13, 4
      %s20 = sphi 0, %s32
      %s21 = sphi 0, %s28
      %s22 = sphi 0, %s20
      %s23 = sphi 0, %s21
      %s24 = sphi 0, %s22
      %s25 = sphi 0, %s23
      %s37 = sphi 0, %s39
      %s40 = sphi 0, %s37
      %s41 = sphi 0, %s40
      %s57 = sphi 0, %s41
      %s65 = sphi 0, %s67
      %s68 = sphi 0, %s65
      %s69 = sphi 0, %s68
      %s85 = sphi 0, %s69
    $region4: #{tpu_custom_call.1} parent=1 // loop_header_branch
      %16 = sbr.rel (%p14) target = $region8
    $region5: #{tpu_custom_call.1} parent=1 // loop_body
      %s18 = ssub.s32 %s13, 1
      %s19 = ssub.s32 %s13, 2
      %s26 = sadd.s32 1, %s21
      %p27 = scmp.ge.s32.totalorder %s26, 2
      %s28 = scalar_select %p27, 0, %s26
      %s29 = sadd.s32 1, %s20
      %s30 = scalar_select %p27, %s29, %s20
      %p31 = scmp.ge.s32.totalorder %s30, 1
      %s32 = scalar_select %p31, 0, %s30
      %s33 = ssub.s32 %s20, %s32
      %s34 = ssub.s32 %s21, %s28
      %s35 = sor.u32 %s33, %s34
      %p36 = scmp.eq.s32.totalorder %s35, 0
      %s38 = sadd.s32 %s37, 1
      %s39 = scalar_select %p36, %s37, %s38
      %p42 = pneg %p36
      %p43 = scmp.eq.s32.totalorder %s13, 1
      %p44 = por %p42, %p43
      %p45 = scmp.ne.s32.totalorder %s37, %s40
      %p46 = scmp.eq.s32.totalorder %s13, 0
      %p47 = por %p45, %p46
      %p48 = scmp.ne.s32.totalorder %s37, %s40
      %p49 = scmp.eq.s32.totalorder %s18, 1
      %p50 = por %p48, %p49
      %p51 = scmp.ne.s32.totalorder %s40, %s41
      %p52 = scmp.eq.s32.totalorder %s18, 0
      %p53 = por %p51, %p52
      %p54 = scmp.ne.s32.totalorder %s40, %s41
      %p55 = scmp.eq.s32.totalorder %s19, 1
      %p56 = por %p54, %p55
      %p58 = scmp.ne.s32.totalorder %s41, %s57
      %p59 = scmp.eq.s32.totalorder %s19, 0
      %p60 = por %p58, %p59
      %s61 = ssub.s32 %s21, %s28
      %s62 = ssub.s32 %s20, %s32
      %s63 = sor.u32 %s61, %s62
      %p64 = scmp.eq.s32.totalorder %s63, 0
      %s66 = sadd.s32 %s65, 1
      %s67 = scalar_select %p64, %s65, %s66
      %p70 = pneg %p64
      %p71 = scmp.eq.s32.totalorder %s13, 1
      %p72 = por %p70, %p71
      %p73 = scmp.ne.s32.totalorder %s65, %s68
      %p74 = scmp.eq.s32.totalorder %s13, 0
      %p75 = por %p73, %p74
      %p76 = scmp.ne.s32.totalorder %s65, %s68
      %p77 = scmp.eq.s32.totalorder %s18, 1
      %p78 = por %p76, %p77
      %p79 = scmp.ne.s32.totalorder %s68, %s69
      %p80 = scmp.eq.s32.totalorder %s18, 0
      %p81 = por %p79, %p80
      %p82 = scmp.ne.s32.totalorder %s68, %s69
      %p83 = scmp.eq.s32.totalorder %s19, 1
      %p84 = por %p82, %p83
      %p86 = scmp.ne.s32.totalorder %s69, %s85
      %p87 = scmp.eq.s32.totalorder %s19, 0
      %p88 = por %p86, %p87
      %p89 = scmp.le.s32.totalorder 1, %s13
      %p90 = scmp.lt.s32.totalorder %s13, 3
      %p91 = pnand %p89, %p90
      %p92 = pneg %p91
      // Predicated region
      $region9: #{tpu_custom_call.1} parent=5 // pred_check
        _
      $region10: #{tpu_custom_call.1} parent=5 // pred_check_branch
        %94 = sbr.rel (%p91) target = $region12
      $region11: #{tpu_custom_call.1} parent=5 // pred_region
        %s95 = ssub.s32 %s13, 1
      $region12: #{tpu_custom_call.1} parent=5 // pred_fallthru
        _
      %p96 = scmp.lt.s32.totalorder %s13, 2
      // Predicated region
      $region13: #{tpu_custom_call.1} parent=5 // pred_check
        %p97 = pneg %p96
      $region14: #{tpu_custom_call.1} parent=5 // pred_check_branch
        %99 = sbr.rel (%p97) target = $region16
      $region15: #{tpu_custom_call.1} parent=5 // pred_region
        // Predicated region
        $region17: #{tpu_custom_call.1} parent=15 // pred_check
          %p100 = pneg %p47
        $region18: #{tpu_custom_call.1} parent=15 // pred_check_branch
          %102 = sbr.rel (%p100) target = $region20
        $region19: #{tpu_custom_call.1} parent=15 // pred_region
          %s103 = sand.u32 %s37, 1
          %s104 = scalar_lea.sflag [#allocation3], %s103
          %s105 = sand.u32 %s37, 1
          %s106 = smul.addr %s105, 2048
          %s107 = scalar_lea.vmem [#allocation2], %s106
          %s108 = smul.u32 64, %s20
          %s109 = smul.u32 4, %s21
          %s111 = ssub.s32 32768, 32768
          %112 = vsyncadd %s104, %s111
          %s113 = smul.addr %s108, 8
          %s114 = sadd.s32 %s109, %s113
          %s115 = smul.addr %s114, 128
          %s116 = scalar_lea.hbm %s0, %s115
          %s117 = sshll.u32 %s107, 4
          %s118 = int_to_ptr.vmem [resolvable:$true] %s117
          %123 = dma.hbm_to_vmem [thread:$0]  %s116, 32768, %s118, %s104, 1024, 512, 32
        $region20: #{tpu_custom_call.1} parent=15 // pred_fallthru
          _
      $region16: #{tpu_custom_call.1} parent=5 // pred_fallthru
        _
      %p124 = scmp.le.s32.totalorder 1, %s13
      %p125 = scmp.lt.s32.totalorder %s13, 3
      %p126 = pnand %p124, %p125
      %p127 = pneg %p126
      // Predicated region
      $region21: #{tpu_custom_call.1} parent=5 // pred_check
        _
      $region22: #{tpu_custom_call.1} parent=5 // pred_check_branch
        %129 = sbr.rel (%p126) target = $region24
      $region23: #{tpu_custom_call.1} parent=5 // pred_region
        %s130 = ssub.s32 %s13, 1
        %s131 = sand.u32 %s40, 1
        %s132 = scalar_lea.sflag [#allocation3], %s131
        %s133 = sand.u32 %s40, 1
        %s134 = smul.addr %s133, 2048
        %s135 = scalar_lea.vmem [#allocation2], %s134
        // Predicated region
        $region25: #{tpu_custom_call.1} parent=23 // pred_check
          %p136 = pneg %p53
        $region26: #{tpu_custom_call.1} parent=23 // pred_check_branch
          %138 = sbr.rel (%p136) target = $region28
        $region27: #{tpu_custom_call.1} parent=23 // pred_region
          %139 = dma.done %s132, 32768
        $region28: #{tpu_custom_call.1} parent=23 // pred_fallthru
          _
        %s140 = sand.u32 %s40, 1
        %s141 = scalar_lea.sflag [#allocation3], %s140
        %s142 = sand.u32 %s40, 1
        %s143 = smul.addr %s142, 2048
        %s144 = scalar_lea.vmem [#allocation2], %s143
        %p145 = pneg %p53
        %p146 = pneg %p50
        %p147 = pneg %p81
        %p148 = pneg %p78
        %s149 = sand.u32 %s68, 1
        %s150 = scalar_lea.sflag [#allocation4], %s149
        %s151 = sand.u32 %s68, 1
        %s152 = smul.addr %s151, 2048
        %s153 = scalar_lea.vmem [#allocation5], %s152
        %s154 = smul.u32 64, %s22
        %s155 = smul.u32 4, %s23
        %s156 = smul.u32 64, %s23
        %s157 = smul.u32 4, %s22
        %v158 = vld [vmem:[%s135] sm:$0xff]
        %v159 = vld [vmem:[%s135 + $0x8] sm:$0xff]
        %v160 = vld [vmem:[%s135 + $0x10] sm:$0xff]
        %v161 = vld [vmem:[%s135 + $0x18] sm:$0xff]
        %v162 = vld [vmem:[%s135 + $0x20] sm:$0xff]
        %v163 = vld [vmem:[%s135 + $0x28] sm:$0xff]
        %v164 = vld [vmem:[%s135 + $0x30] sm:$0xff]
        %v165 = vld [vmem:[%s135 + $0x38] sm:$0xff]
        %v166 = vld [vmem:[%s135 + $0x40] sm:$0xff]
        %v167 = vld [vmem:[%s135 + $0x48] sm:$0xff]
        %v168 = vld [vmem:[%s135 + $0x50] sm:$0xff]
        %v169 = vld [vmem:[%s135 + $0x58] sm:$0xff]
        %v170 = vld [vmem:[%s135 + $0x60] sm:$0xff]
        %v171 = vld [vmem:[%s135 + $0x68] sm:$0xff]
        %v172 = vld [vmem:[%s135 + $0x70] sm:$0xff]
        %v173 = vld [vmem:[%s135 + $0x78] sm:$0xff]
        %v174 = vld [vmem:[%s135 + $0x80] sm:$0xff]
        %v175 = vld [vmem:[%s135 + $0x88] sm:$0xff]
        %v176 = vld [vmem:[%s135 + $0x90] sm:$0xff]
        %v177 = vld [vmem:[%s135 + $0x98] sm:$0xff]
        %v178 = vld [vmem:[%s135 + $0xa0] sm:$0xff]
        %v179 = vld [vmem:[%s135 + $0xa8] sm:$0xff]
        %v180 = vld [vmem:[%s135 + $0xb0] sm:$0xff]
        %v181 = vld [vmem:[%s135 + $0xb8] sm:$0xff]
        %v182 = vld [vmem:[%s135 + $0xc0] sm:$0xff]
        %v183 = vld [vmem:[%s135 + $0xc8] sm:$0xff]
        %v184 = vld [vmem:[%s135 + $0xd0] sm:$0xff]
        %v185 = vld [vmem:[%s135 + $0xd8] sm:$0xff]
        %v186 = vld [vmem:[%s135 + $0xe0] sm:$0xff]
        %v187 = vld [vmem:[%s135 + $0xe8] sm:$0xff]
        %v188 = vld [vmem:[%s135 + $0xf0] sm:$0xff]
        %v189 = vld [vmem:[%s135 + $0xf8] sm:$0xff]
        %v190 = vld [vmem:[%s135 + $0x100] sm:$0xff]
        %v191 = vld [vmem:[%s135 + $0x108] sm:$0xff]
        %v192 = vld [vmem:[%s135 + $0x110] sm:$0xff]
        %v193 = vld [vmem:[%s135 + $0x118] sm:$0xff]
        %v194 = vld [vmem:[%s135 + $0x120] sm:$0xff]
        %v195 = vld [vmem:[%s135 + $0x128] sm:$0xff]
        %v196 = vld [vmem:[%s135 + $0x130] sm:$0xff]
        %v197 = vld [vmem:[%s135 + $0x138] sm:$0xff]
        %v198 = vld [vmem:[%s135 + $0x140] sm:$0xff]
        %v199 = vld [vmem:[%s135 + $0x148] sm:$0xff]
        %v200 = vld [vmem:[%s135 + $0x150] sm:$0xff]
        %v201 = vld [vmem:[%s135 + $0x158] sm:$0xff]
        %v202 = vld [vmem:[%s135 + $0x160] sm:$0xff]
        %v203 = vld [vmem:[%s135 + $0x168] sm:$0xff]
        %v204 = vld [vmem:[%s135 + $0x170] sm:$0xff]
        %v205 = vld [vmem:[%s135 + $0x178] sm:$0xff]
        %v206 = vld [vmem:[%s135 + $0x180] sm:$0xff]
        %v207 = vld [vmem:[%s135 + $0x188] sm:$0xff]
        %v208 = vld [vmem:[%s135 + $0x190] sm:$0xff]
        %v209 = vld [vmem:[%s135 + $0x198] sm:$0xff]
        %v210 = vld [vmem:[%s135 + $0x1a0] sm:$0xff]
        %v211 = vld [vmem:[%s135 + $0x1a8] sm:$0xff]
        %v212 = vld [vmem:[%s135 + $0x1b0] sm:$0xff]
        %v213 = vld [vmem:[%s135 + $0x1b8] sm:$0xff]
        %v214 = vld [vmem:[%s135 + $0x1c0] sm:$0xff]
        %v215 = vld [vmem:[%s135 + $0x1c8] sm:$0xff]
        %v216 = vld [vmem:[%s135 + $0x1d0] sm:$0xff]
        %v217 = vld [vmem:[%s135 + $0x1d8] sm:$0xff]
        %v218 = vld [vmem:[%s135 + $0x1e0] sm:$0xff]
        %v219 = vld [vmem:[%s135 + $0x1e8] sm:$0xff]
        %v220 = vld [vmem:[%s135 + $0x1f0] sm:$0xff]
        %v221 = vld [vmem:[%s135 + $0x1f8] sm:$0xff]
        %v222 = vld [vmem:[%s135 + $0x200] sm:$0xff]
        %v223 = vld [vmem:[%s135 + $0x208] sm:$0xff]
        %v224 = vld [vmem:[%s135 + $0x210] sm:$0xff]
        %v225 = vld [vmem:[%s135 + $0x218] sm:$0xff]
        %v226 = vld [vmem:[%s135 + $0x220] sm:$0xff]
        %v227 = vld [vmem:[%s135 + $0x228] sm:$0xff]
        %v228 = vld [vmem:[%s135 + $0x230] sm:$0xff]
        %v229 = vld [vmem:[%s135 + $0x238] sm:$0xff]
        %v230 = vld [vmem:[%s135 + $0x240] sm:$0xff]
        %v231 = vld [vmem:[%s135 + $0x248] sm:$0xff]
        %v232 = vld [vmem:[%s135 + $0x250] sm:$0xff]
        %v233 = vld [vmem:[%s135 + $0x258] sm:$0xff]
        %v234 = vld [vmem:[%s135 + $0x260] sm:$0xff]
        %v235 = vld [vmem:[%s135 + $0x268] sm:$0xff]
        %v236 = vld [vmem:[%s135 + $0x270] sm:$0xff]
        %v237 = vld [vmem:[%s135 + $0x278] sm:$0xff]
        %v238 = vld [vmem:[%s135 + $0x280] sm:$0xff]
        %v239 = vld [vmem:[%s135 + $0x288] sm:$0xff]
        %v240 = vld [vmem:[%s135 + $0x290] sm:$0xff]
        %v241 = vld [vmem:[%s135 + $0x298] sm:$0xff]
        %v242 = vld [vmem:[%s135 + $0x2a0] sm:$0xff]
        %v243 = vld [vmem:[%s135 + $0x2a8] sm:$0xff]
        %v244 = vld [vmem:[%s135 + $0x2b0] sm:$0xff]
        %v245 = vld [vmem:[%s135 + $0x2b8] sm:$0xff]
        %v246 = vld [vmem:[%s135 + $0x2c0] sm:$0xff]
        %v247 = vld [vmem:[%s135 + $0x2c8] sm:$0xff]
        %v248 = vld [vmem:[%s135 + $0x2d0] sm:$0xff]
        %v249 = vld [vmem:[%s135 + $0x2d8] sm:$0xff]
        %v250 = vld [vmem:[%s135 + $0x2e0] sm:$0xff]
        %v251 = vld [vmem:[%s135 + $0x2e8] sm:$0xff]
        %v252 = vld [vmem:[%s135 + $0x2f0] sm:$0xff]
        %v253 = vld [vmem:[%s135 + $0x2f8] sm:$0xff]
        %v254 = vld [vmem:[%s135 + $0x300] sm:$0xff]
        %v255 = vld [vmem:[%s135 + $0x308] sm:$0xff]
        %v256 = vld [vmem:[%s135 + $0x310] sm:$0xff]
        %v257 = vld [vmem:[%s135 + $0x318] sm:$0xff]
        %v258 = vld [vmem:[%s135 + $0x320] sm:$0xff]
        %v259 = vld [vmem:[%s135 + $0x328] sm:$0xff]
        %v260 = vld [vmem:[%s135 + $0x330] sm:$0xff]
        %v261 = vld [vmem:[%s135 + $0x338] sm:$0xff]
        %v262 = vld [vmem:[%s135 + $0x340] sm:$0xff]
        %v263 = vld [vmem:[%s135 + $0x348] sm:$0xff]
        %v264 = vld [vmem:[%s135 + $0x350] sm:$0xff]
        %v265 = vld [vmem:[%s135 + $0x358] sm:$0xff]
        %v266 = vld [vmem:[%s135 + $0x360] sm:$0xff]
        %v267 = vld [vmem:[%s135 + $0x368] sm:$0xff]
        %v268 = vld [vmem:[%s135 + $0x370] sm:$0xff]
        %v269 = vld [vmem:[%s135 + $0x378] sm:$0xff]
        %v270 = vld [vmem:[%s135 + $0x380] sm:$0xff]
        %v271 = vld [vmem:[%s135 + $0x388] sm:$0xff]
        %v272 = vld [vmem:[%s135 + $0x390] sm:$0xff]
        %v273 = vld [vmem:[%s135 + $0x398] sm:$0xff]
        %v274 = vld [vmem:[%s135 + $0x3a0] sm:$0xff]
        %v275 = vld [vmem:[%s135 + $0x3a8] sm:$0xff]
        %v276 = vld [vmem:[%s135 + $0x3b0] sm:$0xff]
        %v277 = vld [vmem:[%s135 + $0x3b8] sm:$0xff]
        %v278 = vld [vmem:[%s135 + $0x3c0] sm:$0xff]
        %v279 = vld [vmem:[%s135 + $0x3c8] sm:$0xff]
        %v280 = vld [vmem:[%s135 + $0x3d0] sm:$0xff]
        %v281 = vld [vmem:[%s135 + $0x3d8] sm:$0xff]
        %v282 = vld [vmem:[%s135 + $0x3e0] sm:$0xff]
        %v283 = vld [vmem:[%s135 + $0x3e8] sm:$0xff]
        %v284 = vld [vmem:[%s135 + $0x3f0] sm:$0xff]
        %v285 = vld [vmem:[%s135 + $0x3f8] sm:$0xff]
        %v286 = vld [vmem:[%s135 + $0x400] sm:$0xff]
        %v287 = vld [vmem:[%s135 + $0x408] sm:$0xff]
        %v288 = vld [vmem:[%s135 + $0x410] sm:$0xff]
        %v289 = vld [vmem:[%s135 + $0x418] sm:$0xff]
        %v290 = vld [vmem:[%s135 + $0x420] sm:$0xff]
        %v291 = vld [vmem:[%s135 + $0x428] sm:$0xff]
        %v292 = vld [vmem:[%s135 + $0x430] sm:$0xff]
        %v293 = vld [vmem:[%s135 + $0x438] sm:$0xff]
        %v294 = vld [vmem:[%s135 + $0x440] sm:$0xff]
        %v295 = vld [vmem:[%s135 + $0x448] sm:$0xff]
        %v296 = vld [vmem:[%s135 + $0x450] sm:$0xff]
        %v297 = vld [vmem:[%s135 + $0x458] sm:$0xff]
        %v298 = vld [vmem:[%s135 + $0x460] sm:$0xff]
        %v299 = vld [vmem:[%s135 + $0x468] sm:$0xff]
        %v300 = vld [vmem:[%s135 + $0x470] sm:$0xff]
        %v301 = vld [vmem:[%s135 + $0x478] sm:$0xff]
        %v302 = vld [vmem:[%s135 + $0x480] sm:$0xff]
        %v303 = vld [vmem:[%s135 + $0x488] sm:$0xff]
        %v304 = vld [vmem:[%s135 + $0x490] sm:$0xff]
        %v305 = vld [vmem:[%s135 + $0x498] sm:$0xff]
        %v306 = vld [vmem:[%s135 + $0x4a0] sm:$0xff]
        %v307 = vld [vmem:[%s135 + $0x4a8] sm:$0xff]
        %v308 = vld [vmem:[%s135 + $0x4b0] sm:$0xff]
        %v309 = vld [vmem:[%s135 + $0x4b8] sm:$0xff]
        %v310 = vld [vmem:[%s135 + $0x4c0] sm:$0xff]
        %v311 = vld [vmem:[%s135 + $0x4c8] sm:$0xff]
        %v312 = vld [vmem:[%s135 + $0x4d0] sm:$0xff]
        %v313 = vld [vmem:[%s135 + $0x4d8] sm:$0xff]
        %v314 = vld [vmem:[%s135 + $0x4e0] sm:$0xff]
        %v315 = vld [vmem:[%s135 + $0x4e8] sm:$0xff]
        %v316 = vld [vmem:[%s135 + $0x4f0] sm:$0xff]
        %v317 = vld [vmem:[%s135 + $0x4f8] sm:$0xff]
        %v318 = vld [vmem:[%s135 + $0x500] sm:$0xff]
        %v319 = vld [vmem:[%s135 + $0x508] sm:$0xff]
        %v320 = vld [vmem:[%s135 + $0x510] sm:$0xff]
        %v321 = vld [vmem:[%s135 + $0x518] sm:$0xff]
        %v322 = vld [vmem:[%s135 + $0x520] sm:$0xff]
        %v323 = vld [vmem:[%s135 + $0x528] sm:$0xff]
        %v324 = vld [vmem:[%s135 + $0x530] sm:$0xff]
        %v325 = vld [vmem:[%s135 + $0x538] sm:$0xff]
        %v326 = vld [vmem:[%s135 + $0x540] sm:$0xff]
        %v327 = vld [vmem:[%s135 + $0x548] sm:$0xff]
        %v328 = vld [vmem:[%s135 + $0x550] sm:$0xff]
        %v329 = vld [vmem:[%s135 + $0x558] sm:$0xff]
        %v330 = vld [vmem:[%s135 + $0x560] sm:$0xff]
        %v331 = vld [vmem:[%s135 + $0x568] sm:$0xff]
        %v332 = vld [vmem:[%s135 + $0x570] sm:$0xff]
        %v333 = vld [vmem:[%s135 + $0x578] sm:$0xff]
        %v334 = vld [vmem:[%s135 + $0x580] sm:$0xff]
        %v335 = vld [vmem:[%s135 + $0x588] sm:$0xff]
        %v336 = vld [vmem:[%s135 + $0x590] sm:$0xff]
        %v337 = vld [vmem:[%s135 + $0x598] sm:$0xff]
        %v338 = vld [vmem:[%s135 + $0x5a0] sm:$0xff]
        %v339 = vld [vmem:[%s135 + $0x5a8] sm:$0xff]
        %v340 = vld [vmem:[%s135 + $0x5b0] sm:$0xff]
        %v341 = vld [vmem:[%s135 + $0x5b8] sm:$0xff]
        %v342 = vld [vmem:[%s135 + $0x5c0] sm:$0xff]
        %v343 = vld [vmem:[%s135 + $0x5c8] sm:$0xff]
        %v344 = vld [vmem:[%s135 + $0x5d0] sm:$0xff]
        %v345 = vld [vmem:[%s135 + $0x5d8] sm:$0xff]
        %v346 = vld [vmem:[%s135 + $0x5e0] sm:$0xff]
        %v347 = vld [vmem:[%s135 + $0x5e8] sm:$0xff]
        %v348 = vld [vmem:[%s135 + $0x5f0] sm:$0xff]
        %v349 = vld [vmem:[%s135 + $0x5f8] sm:$0xff]
        %v350 = vld [vmem:[%s135 + $0x600] sm:$0xff]
        %v351 = vld [vmem:[%s135 + $0x608] sm:$0xff]
        %v352 = vld [vmem:[%s135 + $0x610] sm:$0xff]
        %v353 = vld [vmem:[%s135 + $0x618] sm:$0xff]
        %v354 = vld [vmem:[%s135 + $0x620] sm:$0xff]
        %v355 = vld [vmem:[%s135 + $0x628] sm:$0xff]
        %v356 = vld [vmem:[%s135 + $0x630] sm:$0xff]
        %v357 = vld [vmem:[%s135 + $0x638] sm:$0xff]
        %v358 = vld [vmem:[%s135 + $0x640] sm:$0xff]
        %v359 = vld [vmem:[%s135 + $0x648] sm:$0xff]
        %v360 = vld [vmem:[%s135 + $0x650] sm:$0xff]
        %v361 = vld [vmem:[%s135 + $0x658] sm:$0xff]
        %v362 = vld [vmem:[%s135 + $0x660] sm:$0xff]
        %v363 = vld [vmem:[%s135 + $0x668] sm:$0xff]
        %v364 = vld [vmem:[%s135 + $0x670] sm:$0xff]
        %v365 = vld [vmem:[%s135 + $0x678] sm:$0xff]
        %v366 = vld [vmem:[%s135 + $0x680] sm:$0xff]
        %v367 = vld [vmem:[%s135 + $0x688] sm:$0xff]
        %v368 = vld [vmem:[%s135 + $0x690] sm:$0xff]
        %v369 = vld [vmem:[%s135 + $0x698] sm:$0xff]
        %v370 = vld [vmem:[%s135 + $0x6a0] sm:$0xff]
        %v371 = vld [vmem:[%s135 + $0x6a8] sm:$0xff]
        %v372 = vld [vmem:[%s135 + $0x6b0] sm:$0xff]
        %v373 = vld [vmem:[%s135 + $0x6b8] sm:$0xff]
        %v374 = vld [vmem:[%s135 + $0x6c0] sm:$0xff]
        %v375 = vld [vmem:[%s135 + $0x6c8] sm:$0xff]
        %v376 = vld [vmem:[%s135 + $0x6d0] sm:$0xff]
        %v377 = vld [vmem:[%s135 + $0x6d8] sm:$0xff]
        %v378 = vld [vmem:[%s135 + $0x6e0] sm:$0xff]
        %v379 = vld [vmem:[%s135 + $0x6e8] sm:$0xff]
        %v380 = vld [vmem:[%s135 + $0x6f0] sm:$0xff]
        %v381 = vld [vmem:[%s135 + $0x6f8] sm:$0xff]
        %v382 = vld [vmem:[%s135 + $0x700] sm:$0xff]
        %v383 = vld [vmem:[%s135 + $0x708] sm:$0xff]
        %v384 = vld [vmem:[%s135 + $0x710] sm:$0xff]
        %v385 = vld [vmem:[%s135 + $0x718] sm:$0xff]
        %v386 = vld [vmem:[%s135 + $0x720] sm:$0xff]
        %v387 = vld [vmem:[%s135 + $0x728] sm:$0xff]
        %v388 = vld [vmem:[%s135 + $0x730] sm:$0xff]
        %v389 = vld [vmem:[%s135 + $0x738] sm:$0xff]
        %v390 = vld [vmem:[%s135 + $0x740] sm:$0xff]
        %v391 = vld [vmem:[%s135 + $0x748] sm:$0xff]
        %v392 = vld [vmem:[%s135 + $0x750] sm:$0xff]
        %v393 = vld [vmem:[%s135 + $0x758] sm:$0xff]
        %v394 = vld [vmem:[%s135 + $0x760] sm:$0xff]
        %v395 = vld [vmem:[%s135 + $0x768] sm:$0xff]
        %v396 = vld [vmem:[%s135 + $0x770] sm:$0xff]
        %v397 = vld [vmem:[%s135 + $0x778] sm:$0xff]
        %v398 = vld [vmem:[%s135 + $0x780] sm:$0xff]
        %v399 = vld [vmem:[%s135 + $0x788] sm:$0xff]
        %v400 = vld [vmem:[%s135 + $0x790] sm:$0xff]
        %v401 = vld [vmem:[%s135 + $0x798] sm:$0xff]
        %v402 = vld [vmem:[%s135 + $0x7a0] sm:$0xff]
        %v403 = vld [vmem:[%s135 + $0x7a8] sm:$0xff]
        %v404 = vld [vmem:[%s135 + $0x7b0] sm:$0xff]
        %v405 = vld [vmem:[%s135 + $0x7b8] sm:$0xff]
        %v406 = vld [vmem:[%s135 + $0x7c0] sm:$0xff]
        %v407 = vld [vmem:[%s135 + $0x7c8] sm:$0xff]
        %v408 = vld [vmem:[%s135 + $0x7d0] sm:$0xff]
        %v409 = vld [vmem:[%s135 + $0x7d8] sm:$0xff]
        %v410 = vld [vmem:[%s135 + $0x7e0] sm:$0xff]
        %v411 = vld [vmem:[%s135 + $0x7e8] sm:$0xff]
        %v412 = vld [vmem:[%s135 + $0x7f0] sm:$0xff]
        %v413 = vld [vmem:[%s135 + $0x7f8] sm:$0xff]
        %vm414 = vcmp.ge.f32.partialorder %v158, 0.0
        %vm415 = vcmp.ge.f32.partialorder %v159, 0.0
        %vm416 = vcmp.ge.f32.partialorder %v160, 0.0
        %vm417 = vcmp.ge.f32.partialorder %v161, 0.0
        %vm418 = vcmp.ge.f32.partialorder %v162, 0.0
        %vm419 = vcmp.ge.f32.partialorder %v163, 0.0
        %vm420 = vcmp.ge.f32.partialorder %v164, 0.0
        %vm421 = vcmp.ge.f32.partialorder %v165, 0.0
        %vm422 = vcmp.ge.f32.partialorder %v166, 0.0
        %vm423 = vcmp.ge.f32.partialorder %v167, 0.0
        %vm424 = vcmp.ge.f32.partialorder %v168, 0.0
        %vm425 = vcmp.ge.f32.partialorder %v169, 0.0
        %vm426 = vcmp.ge.f32.partialorder %v170, 0.0
        %vm427 = vcmp.ge.f32.partialorder %v171, 0.0
        %vm428 = vcmp.ge.f32.partialorder %v172, 0.0
        %vm429 = vcmp.ge.f32.partialorder %v173, 0.0
        %vm430 = vcmp.ge.f32.partialorder %v174, 0.0
        %vm431 = vcmp.ge.f32.partialorder %v175, 0.0
        %vm432 = vcmp.ge.f32.partialorder %v176, 0.0
        %vm433 = vcmp.ge.f32.partialorder %v177, 0.0
        %vm434 = vcmp.ge.f32.partialorder %v178, 0.0
        %vm435 = vcmp.ge.f32.partialorder %v179, 0.0
        %vm436 = vcmp.ge.f32.partialorder %v180, 0.0
        %vm437 = vcmp.ge.f32.partialorder %v181, 0.0
        %vm438 = vcmp.ge.f32.partialorder %v182, 0.0
        %vm439 = vcmp.ge.f32.partialorder %v183, 0.0
        %vm440 = vcmp.ge.f32.partialorder %v184, 0.0
        %vm441 = vcmp.ge.f32.partialorder %v185, 0.0
        %vm442 = vcmp.ge.f32.partialorder %v186, 0.0
        %vm443 = vcmp.ge.f32.partialorder %v187, 0.0
        %vm444 = vcmp.ge.f32.partialorder %v188, 0.0
        %vm445 = vcmp.ge.f32.partialorder %v189, 0.0
        %vm446 = vcmp.ge.f32.partialorder %v190, 0.0
        %vm447 = vcmp.ge.f32.partialorder %v191, 0.0
        %vm448 = vcmp.ge.f32.partialorder %v192, 0.0
        %vm449 = vcmp.ge.f32.partialorder %v193, 0.0
        %vm450 = vcmp.ge.f32.partialorder %v194, 0.0
        %vm451 = vcmp.ge.f32.partialorder %v195, 0.0
        %vm452 = vcmp.ge.f32.partialorder %v196, 0.0
        %vm453 = vcmp.ge.f32.partialorder %v197, 0.0
        %vm454 = vcmp.ge.f32.partialorder %v198, 0.0
        %vm455 = vcmp.ge.f32.partialorder %v199, 0.0
        %vm456 = vcmp.ge.f32.partialorder %v200, 0.0
        %vm457 = vcmp.ge.f32.partialorder %v201, 0.0
        %vm458 = vcmp.ge.f32.partialorder %v202, 0.0
        %vm459 = vcmp.ge.f32.partialorder %v203, 0.0
        %vm460 = vcmp.ge.f32.partialorder %v204, 0.0
        %vm461 = vcmp.ge.f32.partialorder %v205, 0.0
        %vm462 = vcmp.ge.f32.partialorder %v206, 0.0
        %vm463 = vcmp.ge.f32.partialorder %v207, 0.0
        %vm464 = vcmp.ge.f32.partialorder %v208, 0.0
        %vm465 = vcmp.ge.f32.partialorder %v209, 0.0
        %vm466 = vcmp.ge.f32.partialorder %v210, 0.0
        %vm467 = vcmp.ge.f32.partialorder %v211, 0.0
        %vm468 = vcmp.ge.f32.partialorder %v212, 0.0
        %vm469 = vcmp.ge.f32.partialorder %v213, 0.0
        %vm470 = vcmp.ge.f32.partialorder %v214, 0.0
        %vm471 = vcmp.ge.f32.partialorder %v215, 0.0
        %vm472 = vcmp.ge.f32.partialorder %v216, 0.0
        %vm473 = vcmp.ge.f32.partialorder %v217, 0.0
        %vm474 = vcmp.ge.f32.partialorder %v218, 0.0
        %vm475 = vcmp.ge.f32.partialorder %v219, 0.0
        %vm476 = vcmp.ge.f32.partialorder %v220, 0.0
        %vm477 = vcmp.ge.f32.partialorder %v221, 0.0
        %vm478 = vcmp.ge.f32.partialorder %v222, 0.0
        %vm479 = vcmp.ge.f32.partialorder %v223, 0.0
        %vm480 = vcmp.ge.f32.partialorder %v224, 0.0
        %vm481 = vcmp.ge.f32.partialorder %v225, 0.0
        %vm482 = vcmp.ge.f32.partialorder %v226, 0.0
        %vm483 = vcmp.ge.f32.partialorder %v227, 0.0
        %vm484 = vcmp.ge.f32.partialorder %v228, 0.0
        %vm485 = vcmp.ge.f32.partialorder %v229, 0.0
        %vm486 = vcmp.ge.f32.partialorder %v230, 0.0
        %vm487 = vcmp.ge.f32.partialorder %v231, 0.0
        %vm488 = vcmp.ge.f32.partialorder %v232, 0.0
        %vm489 = vcmp.ge.f32.partialorder %v233, 0.0
        %vm490 = vcmp.ge.f32.partialorder %v234, 0.0
        %vm491 = vcmp.ge.f32.partialorder %v235, 0.0
        %vm492 = vcmp.ge.f32.partialorder %v236, 0.0
        %vm493 = vcmp.ge.f32.partialorder %v237, 0.0
        %vm494 = vcmp.ge.f32.partialorder %v238, 0.0
        %vm495 = vcmp.ge.f32.partialorder %v239, 0.0
        %vm496 = vcmp.ge.f32.partialorder %v240, 0.0
        %vm497 = vcmp.ge.f32.partialorder %v241, 0.0
        %vm498 = vcmp.ge.f32.partialorder %v242, 0.0
        %vm499 = vcmp.ge.f32.partialorder %v243, 0.0
        %vm500 = vcmp.ge.f32.partialorder %v244, 0.0
        %vm501 = vcmp.ge.f32.partialorder %v245, 0.0
        %vm502 = vcmp.ge.f32.partialorder %v246, 0.0
        %vm503 = vcmp.ge.f32.partialorder %v247, 0.0
        %vm504 = vcmp.ge.f32.partialorder %v248, 0.0
        %vm505 = vcmp.ge.f32.partialorder %v249, 0.0
        %vm506 = vcmp.ge.f32.partialorder %v250, 0.0
        %vm507 = vcmp.ge.f32.partialorder %v251, 0.0
        %vm508 = vcmp.ge.f32.partialorder %v252, 0.0
        %vm509 = vcmp.ge.f32.partialorder %v253, 0.0
        %vm510 = vcmp.ge.f32.partialorder %v254, 0.0
        %vm511 = vcmp.ge.f32.partialorder %v255, 0.0
        %vm512 = vcmp.ge.f32.partialorder %v256, 0.0
        %vm513 = vcmp.ge.f32.partialorder %v257, 0.0
        %vm514 = vcmp.ge.f32.partialorder %v258, 0.0
        %vm515 = vcmp.ge.f32.partialorder %v259, 0.0
        %vm516 = vcmp.ge.f32.partialorder %v260, 0.0
        %vm517 = vcmp.ge.f32.partialorder %v261, 0.0
        %vm518 = vcmp.ge.f32.partialorder %v262, 0.0
        %vm519 = vcmp.ge.f32.partialorder %v263, 0.0
        %vm520 = vcmp.ge.f32.partialorder %v264, 0.0
        %vm521 = vcmp.ge.f32.partialorder %v265, 0.0
        %vm522 = vcmp.ge.f32.partialorder %v266, 0.0
        %vm523 = vcmp.ge.f32.partialorder %v267, 0.0
        %vm524 = vcmp.ge.f32.partialorder %v268, 0.0
        %vm525 = vcmp.ge.f32.partialorder %v269, 0.0
        %vm526 = vcmp.ge.f32.partialorder %v270, 0.0
        %vm527 = vcmp.ge.f32.partialorder %v271, 0.0
        %vm528 = vcmp.ge.f32.partialorder %v272, 0.0
        %vm529 = vcmp.ge.f32.partialorder %v273, 0.0
        %vm530 = vcmp.ge.f32.partialorder %v274, 0.0
        %vm531 = vcmp.ge.f32.partialorder %v275, 0.0
        %vm532 = vcmp.ge.f32.partialorder %v276, 0.0
        %vm533 = vcmp.ge.f32.partialorder %v277, 0.0
        %vm534 = vcmp.ge.f32.partialorder %v278, 0.0
        %vm535 = vcmp.ge.f32.partialorder %v279, 0.0
        %vm536 = vcmp.ge.f32.partialorder %v280, 0.0
        %vm537 = vcmp.ge.f32.partialorder %v281, 0.0
        %vm538 = vcmp.ge.f32.partialorder %v282, 0.0
        %vm539 = vcmp.ge.f32.partialorder %v283, 0.0
        %vm540 = vcmp.ge.f32.partialorder %v284, 0.0
        %vm541 = vcmp.ge.f32.partialorder %v285, 0.0
        %vm542 = vcmp.ge.f32.partialorder %v286, 0.0
        %vm543 = vcmp.ge.f32.partialorder %v287, 0.0
        %vm544 = vcmp.ge.f32.partialorder %v288, 0.0
        %vm545 = vcmp.ge.f32.partialorder %v289, 0.0
        %vm546 = vcmp.ge.f32.partialorder %v290, 0.0
        %vm547 = vcmp.ge.f32.partialorder %v291, 0.0
        %vm548 = vcmp.ge.f32.partialorder %v292, 0.0
        %vm549 = vcmp.ge.f32.partialorder %v293, 0.0
        %vm550 = vcmp.ge.f32.partialorder %v294, 0.0
        %vm551 = vcmp.ge.f32.partialorder %v295, 0.0
        %vm552 = vcmp.ge.f32.partialorder %v296, 0.0
        %vm553 = vcmp.ge.f32.partialorder %v297, 0.0
        %vm554 = vcmp.ge.f32.partialorder %v298, 0.0
        %vm555 = vcmp.ge.f32.partialorder %v299, 0.0
        %vm556 = vcmp.ge.f32.partialorder %v300, 0.0
        %vm557 = vcmp.ge.f32.partialorder %v301, 0.0
        %vm558 = vcmp.ge.f32.partialorder %v302, 0.0
        %vm559 = vcmp.ge.f32.partialorder %v303, 0.0
        %vm560 = vcmp.ge.f32.partialorder %v304, 0.0
        %vm561 = vcmp.ge.f32.partialorder %v305, 0.0
        %vm562 = vcmp.ge.f32.partialorder %v306, 0.0
        %vm563 = vcmp.ge.f32.partialorder %v307, 0.0
        %vm564 = vcmp.ge.f32.partialorder %v308, 0.0
        %vm565 = vcmp.ge.f32.partialorder %v309, 0.0
        %vm566 = vcmp.ge.f32.partialorder %v310, 0.0
        %vm567 = vcmp.ge.f32.partialorder %v311, 0.0
        %vm568 = vcmp.ge.f32.partialorder %v312, 0.0
        %vm569 = vcmp.ge.f32.partialorder %v313, 0.0
        %vm570 = vcmp.ge.f32.partialorder %v314, 0.0
        %vm571 = vcmp.ge.f32.partialorder %v315, 0.0
        %vm572 = vcmp.ge.f32.partialorder %v316, 0.0
        %vm573 = vcmp.ge.f32.partialorder %v317, 0.0
        %vm574 = vcmp.ge.f32.partialorder %v318, 0.0
        %vm575 = vcmp.ge.f32.partialorder %v319, 0.0
        %vm576 = vcmp.ge.f32.partialorder %v320, 0.0
        %vm577 = vcmp.ge.f32.partialorder %v321, 0.0
        %vm578 = vcmp.ge.f32.partialorder %v322, 0.0
        %vm579 = vcmp.ge.f32.partialorder %v323, 0.0
        %vm580 = vcmp.ge.f32.partialorder %v324, 0.0
        %vm581 = vcmp.ge.f32.partialorder %v325, 0.0
        %vm582 = vcmp.ge.f32.partialorder %v326, 0.0
        %vm583 = vcmp.ge.f32.partialorder %v327, 0.0
        %vm584 = vcmp.ge.f32.partialorder %v328, 0.0
        %vm585 = vcmp.ge.f32.partialorder %v329, 0.0
        %vm586 = vcmp.ge.f32.partialorder %v330, 0.0
        %vm587 = vcmp.ge.f32.partialorder %v331, 0.0
        %vm588 = vcmp.ge.f32.partialorder %v332, 0.0
        %vm589 = vcmp.ge.f32.partialorder %v333, 0.0
        %vm590 = vcmp.ge.f32.partialorder %v334, 0.0
        %vm591 = vcmp.ge.f32.partialorder %v335, 0.0
        %vm592 = vcmp.ge.f32.partialorder %v336, 0.0
        %vm593 = vcmp.ge.f32.partialorder %v337, 0.0
        %vm594 = vcmp.ge.f32.partialorder %v338, 0.0
        %vm595 = vcmp.ge.f32.partialorder %v339, 0.0
        %vm596 = vcmp.ge.f32.partialorder %v340, 0.0
        %vm597 = vcmp.ge.f32.partialorder %v341, 0.0
        %vm598 = vcmp.ge.f32.partialorder %v342, 0.0
        %vm599 = vcmp.ge.f32.partialorder %v343, 0.0
        %vm600 = vcmp.ge.f32.partialorder %v344, 0.0
        %vm601 = vcmp.ge.f32.partialorder %v345, 0.0
        %vm602 = vcmp.ge.f32.partialorder %v346, 0.0
        %vm603 = vcmp.ge.f32.partialorder %v347, 0.0
        %vm604 = vcmp.ge.f32.partialorder %v348, 0.0
        %vm605 = vcmp.ge.f32.partialorder %v349, 0.0
        %vm606 = vcmp.ge.f32.partialorder %v350, 0.0
        %vm607 = vcmp.ge.f32.partialorder %v351, 0.0
        %vm608 = vcmp.ge.f32.partialorder %v352, 0.0
        %vm609 = vcmp.ge.f32.partialorder %v353, 0.0
        %vm610 = vcmp.ge.f32.partialorder %v354, 0.0
        %vm611 = vcmp.ge.f32.partialorder %v355, 0.0
        %vm612 = vcmp.ge.f32.partialorder %v356, 0.0
        %vm613 = vcmp.ge.f32.partialorder %v357, 0.0
        %vm614 = vcmp.ge.f32.partialorder %v358, 0.0
        %vm615 = vcmp.ge.f32.partialorder %v359, 0.0
        %vm616 = vcmp.ge.f32.partialorder %v360, 0.0
        %vm617 = vcmp.ge.f32.partialorder %v361, 0.0
        %vm618 = vcmp.ge.f32.partialorder %v362, 0.0
        %vm619 = vcmp.ge.f32.partialorder %v363, 0.0
        %vm620 = vcmp.ge.f32.partialorder %v364, 0.0
        %vm621 = vcmp.ge.f32.partialorder %v365, 0.0
        %vm622 = vcmp.ge.f32.partialorder %v366, 0.0
        %vm623 = vcmp.ge.f32.partialorder %v367, 0.0
        %vm624 = vcmp.ge.f32.partialorder %v368, 0.0
        %vm625 = vcmp.ge.f32.partialorder %v369, 0.0
        %vm626 = vcmp.ge.f32.partialorder %v370, 0.0
        %vm627 = vcmp.ge.f32.partialorder %v371, 0.0
        %vm628 = vcmp.ge.f32.partialorder %v372, 0.0
        %vm629 = vcmp.ge.f32.partialorder %v373, 0.0
        %vm630 = vcmp.ge.f32.partialorder %v374, 0.0
        %vm631 = vcmp.ge.f32.partialorder %v375, 0.0
        %vm632 = vcmp.ge.f32.partialorder %v376, 0.0
        %vm633 = vcmp.ge.f32.partialorder %v377, 0.0
        %vm634 = vcmp.ge.f32.partialorder %v378, 0.0
        %vm635 = vcmp.ge.f32.partialorder %v379, 0.0
        %vm636 = vcmp.ge.f32.partialorder %v380, 0.0
        %vm637 = vcmp.ge.f32.partialorder %v381, 0.0
        %vm638 = vcmp.ge.f32.partialorder %v382, 0.0
        %vm639 = vcmp.ge.f32.partialorder %v383, 0.0
        %vm640 = vcmp.ge.f32.partialorder %v384, 0.0
        %vm641 = vcmp.ge.f32.partialorder %v385, 0.0
        %vm642 = vcmp.ge.f32.partialorder %v386, 0.0
        %vm643 = vcmp.ge.f32.partialorder %v387, 0.0
        %vm644 = vcmp.ge.f32.partialorder %v388, 0.0
        %vm645 = vcmp.ge.f32.partialorder %v389, 0.0
        %vm646 = vcmp.ge.f32.partialorder %v390, 0.0
        %vm647 = vcmp.ge.f32.partialorder %v391, 0.0
        %vm648 = vcmp.ge.f32.partialorder %v392, 0.0
        %vm649 = vcmp.ge.f32.partialorder %v393, 0.0
        %vm650 = vcmp.ge.f32.partialorder %v394, 0.0
        %vm651 = vcmp.ge.f32.partialorder %v395, 0.0
        %vm652 = vcmp.ge.f32.partialorder %v396, 0.0
        %vm653 = vcmp.ge.f32.partialorder %v397, 0.0
        %vm654 = vcmp.ge.f32.partialorder %v398, 0.0
        %vm655 = vcmp.ge.f32.partialorder %v399, 0.0
        %vm656 = vcmp.ge.f32.partialorder %v400, 0.0
        %vm657 = vcmp.ge.f32.partialorder %v401, 0.0
        %vm658 = vcmp.ge.f32.partialorder %v402, 0.0
        %vm659 = vcmp.ge.f32.partialorder %v403, 0.0
        %vm660 = vcmp.ge.f32.partialorder %v404, 0.0
        %vm661 = vcmp.ge.f32.partialorder %v405, 0.0
        %vm662 = vcmp.ge.f32.partialorder %v406, 0.0
        %vm663 = vcmp.ge.f32.partialorder %v407, 0.0
        %vm664 = vcmp.ge.f32.partialorder %v408, 0.0
        %vm665 = vcmp.ge.f32.partialorder %v409, 0.0
        %vm666 = vcmp.ge.f32.partialorder %v410, 0.0
        %vm667 = vcmp.ge.f32.partialorder %v411, 0.0
        %vm668 = vcmp.ge.f32.partialorder %v412, 0.0
        %vm669 = vcmp.ge.f32.partialorder %v413, 0.0
        %v670 = vmul.f32 %v158, 0.1
        %v671 = vmul.f32 %v159, 0.1
        %v672 = vmul.f32 %v160, 0.1
        %v673 = vmul.f32 %v161, 0.1
        %v674 = vmul.f32 %v162, 0.1
        %v675 = vmul.f32 %v163, 0.1
        %v676 = vmul.f32 %v164, 0.1
        %v677 = vmul.f32 %v165, 0.1
        %v678 = vmul.f32 %v166, 0.1
        %v679 = vmul.f32 %v167, 0.1
        %v680 = vmul.f32 %v168, 0.1
        %v681 = vmul.f32 %v169, 0.1
        %v682 = vmul.f32 %v170, 0.1
        %v683 = vmul.f32 %v171, 0.1
        %v684 = vmul.f32 %v172, 0.1
        %v685 = vmul.f32 %v173, 0.1
        %v686 = vmul.f32 %v174, 0.1
        %v687 = vmul.f32 %v175, 0.1
        %v688 = vmul.f32 %v176, 0.1
        %v689 = vmul.f32 %v177, 0.1
        %v690 = vmul.f32 %v178, 0.1
        %v691 = vmul.f32 %v179, 0.1
        %v692 = vmul.f32 %v180, 0.1
        %v693 = vmul.f32 %v181, 0.1
        %v694 = vmul.f32 %v182, 0.1
        %v695 = vmul.f32 %v183, 0.1
        %v696 = vmul.f32 %v184, 0.1
        %v697 = vmul.f32 %v185, 0.1
        %v698 = vmul.f32 %v186, 0.1
        %v699 = vmul.f32 %v187, 0.1
        %v700 = vmul.f32 %v188, 0.1
        %v701 = vmul.f32 %v189, 0.1
        %v702 = vmul.f32 %v190, 0.1
        %v703 = vmul.f32 %v191, 0.1
        %v704 = vmul.f32 %v192, 0.1
        %v705 = vmul.f32 %v193, 0.1
        %v706 = vmul.f32 %v194, 0.1
        %v707 = vmul.f32 %v195, 0.1
        %v708 = vmul.f32 %v196, 0.1
        %v709 = vmul.f32 %v197, 0.1
        %v710 = vmul.f32 %v198, 0.1
        %v711 = vmul.f32 %v199, 0.1
        %v712 = vmul.f32 %v200, 0.1
        %v713 = vmul.f32 %v201, 0.1
        %v714 = vmul.f32 %v202, 0.1
        %v715 = vmul.f32 %v203, 0.1
        %v716 = vmul.f32 %v204, 0.1
        %v717 = vmul.f32 %v205, 0.1
        %v718 = vmul.f32 %v206, 0.1
        %v719 = vmul.f32 %v207, 0.1
        %v720 = vmul.f32 %v208, 0.1
        %v721 = vmul.f32 %v209, 0.1
        %v722 = vmul.f32 %v210, 0.1
        %v723 = vmul.f32 %v211, 0.1
        %v724 = vmul.f32 %v212, 0.1
        %v725 = vmul.f32 %v213, 0.1
        %v726 = vmul.f32 %v214, 0.1
        %v727 = vmul.f32 %v215, 0.1
        %v728 = vmul.f32 %v216, 0.1
        %v729 = vmul.f32 %v217, 0.1
        %v730 = vmul.f32 %v218, 0.1
        %v731 = vmul.f32 %v219, 0.1
        %v732 = vmul.f32 %v220, 0.1
        %v733 = vmul.f32 %v221, 0.1
        %v734 = vmul.f32 %v222, 0.1
        %v735 = vmul.f32 %v223, 0.1
        %v736 = vmul.f32 %v224, 0.1
        %v737 = vmul.f32 %v225, 0.1
        %v738 = vmul.f32 %v226, 0.1
        %v739 = vmul.f32 %v227, 0.1
        %v740 = vmul.f32 %v228, 0.1
        %v741 = vmul.f32 %v229, 0.1
        %v742 = vmul.f32 %v230, 0.1
        %v743 = vmul.f32 %v231, 0.1
        %v744 = vmul.f32 %v232, 0.1
        %v745 = vmul.f32 %v233, 0.1
        %v746 = vmul.f32 %v234, 0.1
        %v747 = vmul.f32 %v235, 0.1
        %v748 = vmul.f32 %v236, 0.1
        %v749 = vmul.f32 %v237, 0.1
        %v750 = vmul.f32 %v238, 0.1
        %v751 = vmul.f32 %v239, 0.1
        %v752 = vmul.f32 %v240, 0.1
        %v753 = vmul.f32 %v241, 0.1
        %v754 = vmul.f32 %v242, 0.1
        %v755 = vmul.f32 %v243, 0.1
        %v756 = vmul.f32 %v244, 0.1
        %v757 = vmul.f32 %v245, 0.1
        %v758 = vmul.f32 %v246, 0.1
        %v759 = vmul.f32 %v247, 0.1
        %v760 = vmul.f32 %v248, 0.1
        %v761 = vmul.f32 %v249, 0.1
        %v762 = vmul.f32 %v250, 0.1
        %v763 = vmul.f32 %v251, 0.1
        %v764 = vmul.f32 %v252, 0.1
        %v765 = vmul.f32 %v253, 0.1
        %v766 = vmul.f32 %v254, 0.1
        %v767 = vmul.f32 %v255, 0.1
        %v768 = vmul.f32 %v256, 0.1
        %v769 = vmul.f32 %v257, 0.1
        %v770 = vmul.f32 %v258, 0.1
        %v771 = vmul.f32 %v259, 0.1
        %v772 = vmul.f32 %v260, 0.1
        %v773 = vmul.f32 %v261, 0.1
        %v774 = vmul.f32 %v262, 0.1
        %v775 = vmul.f32 %v263, 0.1
        %v776 = vmul.f32 %v264, 0.1
        %v777 = vmul.f32 %v265, 0.1
        %v778 = vmul.f32 %v266, 0.1
        %v779 = vmul.f32 %v267, 0.1
        %v780 = vmul.f32 %v268, 0.1
        %v781 = vmul.f32 %v269, 0.1
        %v782 = vmul.f32 %v270, 0.1
        %v783 = vmul.f32 %v271, 0.1
        %v784 = vmul.f32 %v272, 0.1
        %v785 = vmul.f32 %v273, 0.1
        %v786 = vmul.f32 %v274, 0.1
        %v787 = vmul.f32 %v275, 0.1
        %v788 = vmul.f32 %v276, 0.1
        %v789 = vmul.f32 %v277, 0.1
        %v790 = vmul.f32 %v278, 0.1
        %v791 = vmul.f32 %v279, 0.1
        %v792 = vmul.f32 %v280, 0.1
        %v793 = vmul.f32 %v281, 0.1
        %v794 = vmul.f32 %v282, 0.1
        %v795 = vmul.f32 %v283, 0.1
        %v796 = vmul.f32 %v284, 0.1
        %v797 = vmul.f32 %v285, 0.1
        %v798 = vmul.f32 %v286, 0.1
        %v799 = vmul.f32 %v287, 0.1
        %v800 = vmul.f32 %v288, 0.1
        %v801 = vmul.f32 %v289, 0.1
        %v802 = vmul.f32 %v290, 0.1
        %v803 = vmul.f32 %v291, 0.1
        %v804 = vmul.f32 %v292, 0.1
        %v805 = vmul.f32 %v293, 0.1
        %v806 = vmul.f32 %v294, 0.1
        %v807 = vmul.f32 %v295, 0.1
        %v808 = vmul.f32 %v296, 0.1
        %v809 = vmul.f32 %v297, 0.1
        %v810 = vmul.f32 %v298, 0.1
        %v811 = vmul.f32 %v299, 0.1
        %v812 = vmul.f32 %v300, 0.1
        %v813 = vmul.f32 %v301, 0.1
        %v814 = vmul.f32 %v302, 0.1
        %v815 = vmul.f32 %v303, 0.1
        %v816 = vmul.f32 %v304, 0.1
        %v817 = vmul.f32 %v305, 0.1
        %v818 = vmul.f32 %v306, 0.1
        %v819 = vmul.f32 %v307, 0.1
        %v820 = vmul.f32 %v308, 0.1
        %v821 = vmul.f32 %v309, 0.1
        %v822 = vmul.f32 %v310, 0.1
        %v823 = vmul.f32 %v311, 0.1
        %v824 = vmul.f32 %v312, 0.1
        %v825 = vmul.f32 %v313, 0.1
        %v826 = vmul.f32 %v314, 0.1
        %v827 = vmul.f32 %v315, 0.1
        %v828 = vmul.f32 %v316, 0.1
        %v829 = vmul.f32 %v317, 0.1
        %v830 = vmul.f32 %v318, 0.1
        %v831 = vmul.f32 %v319, 0.1
        %v832 = vmul.f32 %v320, 0.1
        %v833 = vmul.f32 %v321, 0.1
        %v834 = vmul.f32 %v322, 0.1
        %v835 = vmul.f32 %v323, 0.1
        %v836 = vmul.f32 %v324, 0.1
        %v837 = vmul.f32 %v325, 0.1
        %v838 = vmul.f32 %v326, 0.1
        %v839 = vmul.f32 %v327, 0.1
        %v840 = vmul.f32 %v328, 0.1
        %v841 = vmul.f32 %v329, 0.1
        %v842 = vmul.f32 %v330, 0.1
        %v843 = vmul.f32 %v331, 0.1
        %v844 = vmul.f32 %v332, 0.1
        %v845 = vmul.f32 %v333, 0.1
        %v846 = vmul.f32 %v334, 0.1
        %v847 = vmul.f32 %v335, 0.1
        %v848 = vmul.f32 %v336, 0.1
        %v849 = vmul.f32 %v337, 0.1
        %v850 = vmul.f32 %v338, 0.1
        %v851 = vmul.f32 %v339, 0.1
        %v852 = vmul.f32 %v340, 0.1
        %v853 = vmul.f32 %v341, 0.1
        %v854 = vmul.f32 %v342, 0.1
        %v855 = vmul.f32 %v343, 0.1
        %v856 = vmul.f32 %v344, 0.1
        %v857 = vmul.f32 %v345, 0.1
        %v858 = vmul.f32 %v346, 0.1
        %v859 = vmul.f32 %v347, 0.1
        %v860 = vmul.f32 %v348, 0.1
        %v861 = vmul.f32 %v349, 0.1
        %v862 = vmul.f32 %v350, 0.1
        %v863 = vmul.f32 %v351, 0.1
        %v864 = vmul.f32 %v352, 0.1
        %v865 = vmul.f32 %v353, 0.1
        %v866 = vmul.f32 %v354, 0.1
        %v867 = vmul.f32 %v355, 0.1
        %v868 = vmul.f32 %v356, 0.1
        %v869 = vmul.f32 %v357, 0.1
        %v870 = vmul.f32 %v358, 0.1
        %v871 = vmul.f32 %v359, 0.1
        %v872 = vmul.f32 %v360, 0.1
        %v873 = vmul.f32 %v361, 0.1
        %v874 = vmul.f32 %v362, 0.1
        %v875 = vmul.f32 %v363, 0.1
        %v876 = vmul.f32 %v364, 0.1
        %v877 = vmul.f32 %v365, 0.1
        %v878 = vmul.f32 %v366, 0.1
        %v879 = vmul.f32 %v367, 0.1
        %v880 = vmul.f32 %v368, 0.1
        %v881 = vmul.f32 %v369, 0.1
        %v882 = vmul.f32 %v370, 0.1
        %v883 = vmul.f32 %v371, 0.1
        %v884 = vmul.f32 %v372, 0.1
        %v885 = vmul.f32 %v373, 0.1
        %v886 = vmul.f32 %v374, 0.1
        %v887 = vmul.f32 %v375, 0.1
        %v888 = vmul.f32 %v376, 0.1
        %v889 = vmul.f32 %v377, 0.1
        %v890 = vmul.f32 %v378, 0.1
        %v891 = vmul.f32 %v379, 0.1
        %v892 = vmul.f32 %v380, 0.1
        %v893 = vmul.f32 %v381, 0.1
        %v894 = vmul.f32 %v382, 0.1
        %v895 = vmul.f32 %v383, 0.1
        %v896 = vmul.f32 %v384, 0.1
        %v897 = vmul.f32 %v385, 0.1
        %v898 = vmul.f32 %v386, 0.1
        %v899 = vmul.f32 %v387, 0.1
        %v900 = vmul.f32 %v388, 0.1
        %v901 = vmul.f32 %v389, 0.1
        %v902 = vmul.f32 %v390, 0.1
        %v903 = vmul.f32 %v391, 0.1
        %v904 = vmul.f32 %v392, 0.1
        %v905 = vmul.f32 %v393, 0.1
        %v906 = vmul.f32 %v394, 0.1
        %v907 = vmul.f32 %v395, 0.1
        %v908 = vmul.f32 %v396, 0.1
        %v909 = vmul.f32 %v397, 0.1
        %v910 = vmul.f32 %v398, 0.1
        %v911 = vmul.f32 %v399, 0.1
        %v912 = vmul.f32 %v400, 0.1
        %v913 = vmul.f32 %v401, 0.1
        %v914 = vmul.f32 %v402, 0.1
        %v915 = vmul.f32 %v403, 0.1
        %v916 = vmul.f32 %v404, 0.1
        %v917 = vmul.f32 %v405, 0.1
        %v918 = vmul.f32 %v406, 0.1
        %v919 = vmul.f32 %v407, 0.1
        %v920 = vmul.f32 %v408, 0.1
        %v921 = vmul.f32 %v409, 0.1
        %v922 = vmul.f32 %v410, 0.1
        %v923 = vmul.f32 %v411, 0.1
        %v924 = vmul.f32 %v412, 0.1
        %v925 = vmul.f32 %v413, 0.1
        %v926 = vsel %vm414, %v158, %v670
        %v927 = vsel %vm415, %v159, %v671
        %v928 = vsel %vm416, %v160, %v672
        %v929 = vsel %vm417, %v161, %v673
        %v930 = vsel %vm418, %v162, %v674
        %v931 = vsel %vm419, %v163, %v675
        %v932 = vsel %vm420, %v164, %v676
        %v933 = vsel %vm421, %v165, %v677
        %v934 = vsel %vm422, %v166, %v678
        %v935 = vsel %vm423, %v167, %v679
        %v936 = vsel %vm424, %v168, %v680
        %v937 = vsel %vm425, %v169, %v681
        %v938 = vsel %vm426, %v170, %v682
        %v939 = vsel %vm427, %v171, %v683
        %v940 = vsel %vm428, %v172, %v684
        %v941 = vsel %vm429, %v173, %v685
        %v942 = vsel %vm430, %v174, %v686
        %v943 = vsel %vm431, %v175, %v687
        %v944 = vsel %vm432, %v176, %v688
        %v945 = vsel %vm433, %v177, %v689
        %v946 = vsel %vm434, %v178, %v690
        %v947 = vsel %vm435, %v179, %v691
        %v948 = vsel %vm436, %v180, %v692
        %v949 = vsel %vm437, %v181, %v693
        %v950 = vsel %vm438, %v182, %v694
        %v951 = vsel %vm439, %v183, %v695
        %v952 = vsel %vm440, %v184, %v696
        %v953 = vsel %vm441, %v185, %v697
        %v954 = vsel %vm442, %v186, %v698
        %v955 = vsel %vm443, %v187, %v699
        %v956 = vsel %vm444, %v188, %v700
        %v957 = vsel %vm445, %v189, %v701
        %v958 = vsel %vm446, %v190, %v702
        %v959 = vsel %vm447, %v191, %v703
        %v960 = vsel %vm448, %v192, %v704
        %v961 = vsel %vm449, %v193, %v705
        %v962 = vsel %vm450, %v194, %v706
        %v963 = vsel %vm451, %v195, %v707
        %v964 = vsel %vm452, %v196, %v708
        %v965 = vsel %vm453, %v197, %v709
        %v966 = vsel %vm454, %v198, %v710
        %v967 = vsel %vm455, %v199, %v711
        %v968 = vsel %vm456, %v200, %v712
        %v969 = vsel %vm457, %v201, %v713
        %v970 = vsel %vm458, %v202, %v714
        %v971 = vsel %vm459, %v203, %v715
        %v972 = vsel %vm460, %v204, %v716
        %v973 = vsel %vm461, %v205, %v717
        %v974 = vsel %vm462, %v206, %v718
        %v975 = vsel %vm463, %v207, %v719
        %v976 = vsel %vm464, %v208, %v720
        %v977 = vsel %vm465, %v209, %v721
        %v978 = vsel %vm466, %v210, %v722
        %v979 = vsel %vm467, %v211, %v723
        %v980 = vsel %vm468, %v212, %v724
        %v981 = vsel %vm469, %v213, %v725
        %v982 = vsel %vm470, %v214, %v726
        %v983 = vsel %vm471, %v215, %v727
        %v984 = vsel %vm472, %v216, %v728
        %v985 = vsel %vm473, %v217, %v729
        %v986 = vsel %vm474, %v218, %v730
        %v987 = vsel %vm475, %v219, %v731
        %v988 = vsel %vm476, %v220, %v732
        %v989 = vsel %vm477, %v221, %v733
        %v990 = vsel %vm478, %v222, %v734
        %v991 = vsel %vm479, %v223, %v735
        %v992 = vsel %vm480, %v224, %v736
        %v993 = vsel %vm481, %v225, %v737
        %v994 = vsel %vm482, %v226, %v738
        %v995 = vsel %vm483, %v227, %v739
        %v996 = vsel %vm484, %v228, %v740
        %v997 = vsel %vm485, %v229, %v741
        %v998 = vsel %vm486, %v230, %v742
        %v999 = vsel %vm487, %v231, %v743
        %v1000 = vsel %vm488, %v232, %v744
        %v1001 = vsel %vm489, %v233, %v745
        %v1002 = vsel %vm490, %v234, %v746
        %v1003 = vsel %vm491, %v235, %v747
        %v1004 = vsel %vm492, %v236, %v748
        %v1005 = vsel %vm493, %v237, %v749
        %v1006 = vsel %vm494, %v238, %v750
        %v1007 = vsel %vm495, %v239, %v751
        %v1008 = vsel %vm496, %v240, %v752
        %v1009 = vsel %vm497, %v241, %v753
        %v1010 = vsel %vm498, %v242, %v754
        %v1011 = vsel %vm499, %v243, %v755
        %v1012 = vsel %vm500, %v244, %v756
        %v1013 = vsel %vm501, %v245, %v757
        %v1014 = vsel %vm502, %v246, %v758
        %v1015 = vsel %vm503, %v247, %v759
        %v1016 = vsel %vm504, %v248, %v760
        %v1017 = vsel %vm505, %v249, %v761
        %v1018 = vsel %vm506, %v250, %v762
        %v1019 = vsel %vm507, %v251, %v763
        %v1020 = vsel %vm508, %v252, %v764
        %v1021 = vsel %vm509, %v253, %v765
        %v1022 = vsel %vm510, %v254, %v766
        %v1023 = vsel %vm511, %v255, %v767
        %v1024 = vsel %vm512, %v256, %v768
        %v1025 = vsel %vm513, %v257, %v769
        %v1026 = vsel %vm514, %v258, %v770
        %v1027 = vsel %vm515, %v259, %v771
        %v1028 = vsel %vm516, %v260, %v772
        %v1029 = vsel %vm517, %v261, %v773
        %v1030 = vsel %vm518, %v262, %v774
        %v1031 = vsel %vm519, %v263, %v775
        %v1032 = vsel %vm520, %v264, %v776
        %v1033 = vsel %vm521, %v265, %v777
        %v1034 = vsel %vm522, %v266, %v778
        %v1035 = vsel %vm523, %v267, %v779
        %v1036 = vsel %vm524, %v268, %v780
        %v1037 = vsel %vm525, %v269, %v781
        %v1038 = vsel %vm526, %v270, %v782
        %v1039 = vsel %vm527, %v271, %v783
        %v1040 = vsel %vm528, %v272, %v784
        %v1041 = vsel %vm529, %v273, %v785
        %v1042 = vsel %vm530, %v274, %v786
        %v1043 = vsel %vm531, %v275, %v787
        %v1044 = vsel %vm532, %v276, %v788
        %v1045 = vsel %vm533, %v277, %v789
        %v1046 = vsel %vm534, %v278, %v790
        %v1047 = vsel %vm535, %v279, %v791
        %v1048 = vsel %vm536, %v280, %v792
        %v1049 = vsel %vm537, %v281, %v793
        %v1050 = vsel %vm538, %v282, %v794
        %v1051 = vsel %vm539, %v283, %v795
        %v1052 = vsel %vm540, %v284, %v796
        %v1053 = vsel %vm541, %v285, %v797
        %v1054 = vsel %vm542, %v286, %v798
        %v1055 = vsel %vm543, %v287, %v799
        %v1056 = vsel %vm544, %v288, %v800
        %v1057 = vsel %vm545, %v289, %v801
        %v1058 = vsel %vm546, %v290, %v802
        %v1059 = vsel %vm547, %v291, %v803
        %v1060 = vsel %vm548, %v292, %v804
        %v1061 = vsel %vm549, %v293, %v805
        %v1062 = vsel %vm550, %v294, %v806
        %v1063 = vsel %vm551, %v295, %v807
        %v1064 = vsel %vm552, %v296, %v808
        %v1065 = vsel %vm553, %v297, %v809
        %v1066 = vsel %vm554, %v298, %v810
        %v1067 = vsel %vm555, %v299, %v811
        %v1068 = vsel %vm556, %v300, %v812
        %v1069 = vsel %vm557, %v301, %v813
        %v1070 = vsel %vm558, %v302, %v814
        %v1071 = vsel %vm559, %v303, %v815
        %v1072 = vsel %vm560, %v304, %v816
        %v1073 = vsel %vm561, %v305, %v817
        %v1074 = vsel %vm562, %v306, %v818
        %v1075 = vsel %vm563, %v307, %v819
        %v1076 = vsel %vm564, %v308, %v820
        %v1077 = vsel %vm565, %v309, %v821
        %v1078 = vsel %vm566, %v310, %v822
        %v1079 = vsel %vm567, %v311, %v823
        %v1080 = vsel %vm568, %v312, %v824
        %v1081 = vsel %vm569, %v313, %v825
        %v1082 = vsel %vm570, %v314, %v826
        %v1083 = vsel %vm571, %v315, %v827
        %v1084 = vsel %vm572, %v316, %v828
        %v1085 = vsel %vm573, %v317, %v829
        %v1086 = vsel %vm574, %v318, %v830
        %v1087 = vsel %vm575, %v319, %v831
        %v1088 = vsel %vm576, %v320, %v832
        %v1089 = vsel %vm577, %v321, %v833
        %v1090 = vsel %vm578, %v322, %v834
        %v1091 = vsel %vm579, %v323, %v835
        %v1092 = vsel %vm580, %v324, %v836
        %v1093 = vsel %vm581, %v325, %v837
        %v1094 = vsel %vm582, %v326, %v838
        %v1095 = vsel %vm583, %v327, %v839
        %v1096 = vsel %vm584, %v328, %v840
        %v1097 = vsel %vm585, %v329, %v841
        %v1098 = vsel %vm586, %v330, %v842
        %v1099 = vsel %vm587, %v331, %v843
        %v1100 = vsel %vm588, %v332, %v844
        %v1101 = vsel %vm589, %v333, %v845
        %v1102 = vsel %vm590, %v334, %v846
        %v1103 = vsel %vm591, %v335, %v847
        %v1104 = vsel %vm592, %v336, %v848
        %v1105 = vsel %vm593, %v337, %v849
        %v1106 = vsel %vm594, %v338, %v850
        %v1107 = vsel %vm595, %v339, %v851
        %v1108 = vsel %vm596, %v340, %v852
        %v1109 = vsel %vm597, %v341, %v853
        %v1110 = vsel %vm598, %v342, %v854
        %v1111 = vsel %vm599, %v343, %v855
        %v1112 = vsel %vm600, %v344, %v856
        %v1113 = vsel %vm601, %v345, %v857
        %v1114 = vsel %vm602, %v346, %v858
        %v1115 = vsel %vm603, %v347, %v859
        %v1116 = vsel %vm604, %v348, %v860
        %v1117 = vsel %vm605, %v349, %v861
        %v1118 = vsel %vm606, %v350, %v862
        %v1119 = vsel %vm607, %v351, %v863
        %v1120 = vsel %vm608, %v352, %v864
        %v1121 = vsel %vm609, %v353, %v865
        %v1122 = vsel %vm610, %v354, %v866
        %v1123 = vsel %vm611, %v355, %v867
        %v1124 = vsel %vm612, %v356, %v868
        %v1125 = vsel %vm613, %v357, %v869
        %v1126 = vsel %vm614, %v358, %v870
        %v1127 = vsel %vm615, %v359, %v871
        %v1128 = vsel %vm616, %v360, %v872
        %v1129 = vsel %vm617, %v361, %v873
        %v1130 = vsel %vm618, %v362, %v874
        %v1131 = vsel %vm619, %v363, %v875
        %v1132 = vsel %vm620, %v364, %v876
        %v1133 = vsel %vm621, %v365, %v877
        %v1134 = vsel %vm622, %v366, %v878
        %v1135 = vsel %vm623, %v367, %v879
        %v1136 = vsel %vm624, %v368, %v880
        %v1137 = vsel %vm625, %v369, %v881
        %v1138 = vsel %vm626, %v370, %v882
        %v1139 = vsel %vm627, %v371, %v883
        %v1140 = vsel %vm628, %v372, %v884
        %v1141 = vsel %vm629, %v373, %v885
        %v1142 = vsel %vm630, %v374, %v886
        %v1143 = vsel %vm631, %v375, %v887
        %v1144 = vsel %vm632, %v376, %v888
        %v1145 = vsel %vm633, %v377, %v889
        %v1146 = vsel %vm634, %v378, %v890
        %v1147 = vsel %vm635, %v379, %v891
        %v1148 = vsel %vm636, %v380, %v892
        %v1149 = vsel %vm637, %v381, %v893
        %v1150 = vsel %vm638, %v382, %v894
        %v1151 = vsel %vm639, %v383, %v895
        %v1152 = vsel %vm640, %v384, %v896
        %v1153 = vsel %vm641, %v385, %v897
        %v1154 = vsel %vm642, %v386, %v898
        %v1155 = vsel %vm643, %v387, %v899
        %v1156 = vsel %vm644, %v388, %v900
        %v1157 = vsel %vm645, %v389, %v901
        %v1158 = vsel %vm646, %v390, %v902
        %v1159 = vsel %vm647, %v391, %v903
        %v1160 = vsel %vm648, %v392, %v904
        %v1161 = vsel %vm649, %v393, %v905
        %v1162 = vsel %vm650, %v394, %v906
        %v1163 = vsel %vm651, %v395, %v907
        %v1164 = vsel %vm652, %v396, %v908
        %v1165 = vsel %vm653, %v397, %v909
        %v1166 = vsel %vm654, %v398, %v910
        %v1167 = vsel %vm655, %v399, %v911
        %v1168 = vsel %vm656, %v400, %v912
        %v1169 = vsel %vm657, %v401, %v913
        %v1170 = vsel %vm658, %v402, %v914
        %v1171 = vsel %vm659, %v403, %v915
        %v1172 = vsel %vm660, %v404, %v916
        %v1173 = vsel %vm661, %v405, %v917
        %v1174 = vsel %vm662, %v406, %v918
        %v1175 = vsel %vm663, %v407, %v919
        %v1176 = vsel %vm664, %v408, %v920
        %v1177 = vsel %vm665, %v409, %v921
        %v1178 = vsel %vm666, %v410, %v922
        %v1179 = vsel %vm667, %v411, %v923
        %v1180 = vsel %vm668, %v412, %v924
        %v1181 = vsel %vm669, %v413, %v925
        %1182 = vxpose.xlu0.b32.start [1/16] %v926, 128
        %1183 = vxpose.xlu0.b32.cont [2/16] %v930, 128
        %1184 = vxpose.xlu0.b32.cont [3/16] %v934, 128
        %1185 = vxpose.xlu0.b32.cont [4/16] %v938, 128
        %1186 = vxpose.xlu0.b32.cont [5/16] %v942, 128
        %1187 = vxpose.xlu0.b32.cont [6/16] %v946, 128
        %1188 = vxpose.xlu0.b32.cont [7/16] %v950, 128
        %1189 = vxpose.xlu0.b32.cont [8/16] %v954, 128
        %1190 = vxpose.xlu0.b32.cont [9/16] %v958, 128
        %1191 = vxpose.xlu0.b32.cont [10/16] %v962, 128
        %1192 = vxpose.xlu0.b32.cont [11/16] %v966, 128
        %1193 = vxpose.xlu0.b32.cont [12/16] %v970, 128
        %1194 = vxpose.xlu0.b32.cont [13/16] %v974, 128
        %1195 = vxpose.xlu0.b32.cont [14/16] %v978, 128
        %1196 = vxpose.xlu0.b32.cont [15/16] %v982, 128
        %1197 = vxpose.xlu0.b32.end [16/16] %v986, 128
        %v1198 = vpop.trf.xlu0
        %v1199 = vpop.trf.xlu0
        %v1200 = vpop.trf.xlu0
        %v1201 = vpop.trf.xlu0
        %v1202 = vpop.trf.xlu0
        %v1203 = vpop.trf.xlu0
        %v1204 = vpop.trf.xlu0
        %v1205 = vpop.trf.xlu0
        %v1206 = vpop.trf.xlu0
        %v1207 = vpop.trf.xlu0
        %v1208 = vpop.trf.xlu0
        %v1209 = vpop.trf.xlu0
        %v1210 = vpop.trf.xlu0
        %v1211 = vpop.trf.xlu0
        %v1212 = vpop.trf.xlu0
        %v1213 = vpop.trf.xlu0
        %1214 = vxpose.xlu0.b32.start [1/16] %v927, 128
        %1215 = vxpose.xlu0.b32.cont [2/16] %v931, 128
        %1216 = vxpose.xlu0.b32.cont [3/16] %v935, 128
        %1217 = vxpose.xlu0.b32.cont [4/16] %v939, 128
        %1218 = vxpose.xlu0.b32.cont [5/16] %v943, 128
        %1219 = vxpose.xlu0.b32.cont [6/16] %v947, 128
        %1220 = vxpose.xlu0.b32.cont [7/16] %v951, 128
        %1221 = vxpose.xlu0.b32.cont [8/16] %v955, 128
        %1222 = vxpose.xlu0.b32.cont [9/16] %v959, 128
        %1223 = vxpose.xlu0.b32.cont [10/16] %v963, 128
        %1224 = vxpose.xlu0.b32.cont [11/16] %v967, 128
        %1225 = vxpose.xlu0.b32.cont [12/16] %v971, 128
        %1226 = vxpose.xlu0.b32.cont [13/16] %v975, 128
        %1227 = vxpose.xlu0.b32.cont [14/16] %v979, 128
        %1228 = vxpose.xlu0.b32.cont [15/16] %v983, 128
        %1229 = vxpose.xlu0.b32.end [16/16] %v987, 128
        %v1230 = vpop.trf.xlu0
        %v1231 = vpop.trf.xlu0
        %v1232 = vpop.trf.xlu0
        %v1233 = vpop.trf.xlu0
        %v1234 = vpop.trf.xlu0
        %v1235 = vpop.trf.xlu0
        %v1236 = vpop.trf.xlu0
        %v1237 = vpop.trf.xlu0
        %v1238 = vpop.trf.xlu0
        %v1239 = vpop.trf.xlu0
        %v1240 = vpop.trf.xlu0
        %v1241 = vpop.trf.xlu0
        %v1242 = vpop.trf.xlu0
        %v1243 = vpop.trf.xlu0
        %v1244 = vpop.trf.xlu0
        %v1245 = vpop.trf.xlu0
        %1246 = vxpose.xlu0.b32.start [1/16] %v928, 128
        %1247 = vxpose.xlu0.b32.cont [2/16] %v932, 128
        %1248 = vxpose.xlu0.b32.cont [3/16] %v936, 128
        %1249 = vxpose.xlu0.b32.cont [4/16] %v940, 128
        %1250 = vxpose.xlu0.b32.cont [5/16] %v944, 128
        %1251 = vxpose.xlu0.b32.cont [6/16] %v948, 128
        %1252 = vxpose.xlu0.b32.cont [7/16] %v952, 128
        %1253 = vxpose.xlu0.b32.cont [8/16] %v956, 128
        %1254 = vxpose.xlu0.b32.cont [9/16] %v960, 128
        %1255 = vxpose.xlu0.b32.cont [10/16] %v964, 128
        %1256 = vxpose.xlu0.b32.cont [11/16] %v968, 128
        %1257 = vxpose.xlu0.b32.cont [12/16] %v972, 128
        %1258 = vxpose.xlu0.b32.cont [13/16] %v976, 128
        %1259 = vxpose.xlu0.b32.cont [14/16] %v980, 128
        %1260 = vxpose.xlu0.b32.cont [15/16] %v984, 128
        %1261 = vxpose.xlu0.b32.end [16/16] %v988, 128
        %v1262 = vpop.trf.xlu0
        %v1263 = vpop.trf.xlu0
        %v1264 = vpop.trf.xlu0
        %v1265 = vpop.trf.xlu0
        %v1266 = vpop.trf.xlu0
        %v1267 = vpop.trf.xlu0
        %v1268 = vpop.trf.xlu0
        %v1269 = vpop.trf.xlu0
        %v1270 = vpop.trf.xlu0
        %v1271 = vpop.trf.xlu0
        %v1272 = vpop.trf.xlu0
        %v1273 = vpop.trf.xlu0
        %v1274 = vpop.trf.xlu0
        %v1275 = vpop.trf.xlu0
        %v1276 = vpop.trf.xlu0
        %v1277 = vpop.trf.xlu0
        %1278 = vxpose.xlu0.b32.start [1/16] %v929, 128
        %1279 = vxpose.xlu0.b32.cont [2/16] %v933, 128
        %1280 = vxpose.xlu0.b32.cont [3/16] %v937, 128
        %1281 = vxpose.xlu0.b32.cont [4/16] %v941, 128
        %1282 = vxpose.xlu0.b32.cont [5/16] %v945, 128
        %1283 = vxpose.xlu0.b32.cont [6/16] %v949, 128
        %1284 = vxpose.xlu0.b32.cont [7/16] %v953, 128
        %1285 = vxpose.xlu0.b32.cont [8/16] %v957, 128
        %1286 = vxpose.xlu0.b32.cont [9/16] %v961, 128
        %1287 = vxpose.xlu0.b32.cont [10/16] %v965, 128
        %1288 = vxpose.xlu0.b32.cont [11/16] %v969, 128
        %1289 = vxpose.xlu0.b32.cont [12/16] %v973, 128
        %1290 = vxpose.xlu0.b32.cont [13/16] %v977, 128
        %1291 = vxpose.xlu0.b32.cont [14/16] %v981, 128
        %1292 = vxpose.xlu0.b32.cont [15/16] %v985, 128
        %1293 = vxpose.xlu0.b32.end [16/16] %v989, 128
        %v1294 = vpop.trf.xlu0
        %v1295 = vpop.trf.xlu0
        %v1296 = vpop.trf.xlu0
        %v1297 = vpop.trf.xlu0
        %v1298 = vpop.trf.xlu0
        %v1299 = vpop.trf.xlu0
        %v1300 = vpop.trf.xlu0
        %v1301 = vpop.trf.xlu0
        %v1302 = vpop.trf.xlu0
        %v1303 = vpop.trf.xlu0
        %v1304 = vpop.trf.xlu0
        %v1305 = vpop.trf.xlu0
        %v1306 = vpop.trf.xlu0
        %v1307 = vpop.trf.xlu0
        %v1308 = vpop.trf.xlu0
        %v1309 = vpop.trf.xlu0
        %1310 = vxpose.xlu0.b32.start [1/16] %v990, 128
        %1311 = vxpose.xlu0.b32.cont [2/16] %v994, 128
        %1312 = vxpose.xlu0.b32.cont [3/16] %v998, 128
        %1313 = vxpose.xlu0.b32.cont [4/16] %v1002, 128
        %1314 = vxpose.xlu0.b32.cont [5/16] %v1006, 128
        %1315 = vxpose.xlu0.b32.cont [6/16] %v1010, 128
        %1316 = vxpose.xlu0.b32.cont [7/16] %v1014, 128
        %1317 = vxpose.xlu0.b32.cont [8/16] %v1018, 128
        %1318 = vxpose.xlu0.b32.cont [9/16] %v1022, 128
        %1319 = vxpose.xlu0.b32.cont [10/16] %v1026, 128
        %1320 = vxpose.xlu0.b32.cont [11/16] %v1030, 128
        %1321 = vxpose.xlu0.b32.cont [12/16] %v1034, 128
        %1322 = vxpose.xlu0.b32.cont [13/16] %v1038, 128
        %1323 = vxpose.xlu0.b32.cont [14/16] %v1042, 128
        %1324 = vxpose.xlu0.b32.cont [15/16] %v1046, 128
        %1325 = vxpose.xlu0.b32.end [16/16] %v1050, 128
        %v1326 = vpop.trf.xlu0
        %v1327 = vpop.trf.xlu0
        %v1328 = vpop.trf.xlu0
        %v1329 = vpop.trf.xlu0
        %v1330 = vpop.trf.xlu0
        %v1331 = vpop.trf.xlu0
        %v1332 = vpop.trf.xlu0
        %v1333 = vpop.trf.xlu0
        %v1334 = vpop.trf.xlu0
        %v1335 = vpop.trf.xlu0
        %v1336 = vpop.trf.xlu0
        %v1337 = vpop.trf.xlu0
        %v1338 = vpop.trf.xlu0
        %v1339 = vpop.trf.xlu0
        %v1340 = vpop.trf.xlu0
        %v1341 = vpop.trf.xlu0
        %1342 = vxpose.xlu0.b32.start [1/16] %v991, 128
        %1343 = vxpose.xlu0.b32.cont [2/16] %v995, 128
        %1344 = vxpose.xlu0.b32.cont [3/16] %v999, 128
        %1345 = vxpose.xlu0.b32.cont [4/16] %v1003, 128
        %1346 = vxpose.xlu0.b32.cont [5/16] %v1007, 128
        %1347 = vxpose.xlu0.b32.cont [6/16] %v1011, 128
        %1348 = vxpose.xlu0.b32.cont [7/16] %v1015, 128
        %1349 = vxpose.xlu0.b32.cont [8/16] %v1019, 128
        %1350 = vxpose.xlu0.b32.cont [9/16] %v1023, 128
        %1351 = vxpose.xlu0.b32.cont [10/16] %v1027, 128
        %1352 = vxpose.xlu0.b32.cont [11/16] %v1031, 128
        %1353 = vxpose.xlu0.b32.cont [12/16] %v1035, 128
        %1354 = vxpose.xlu0.b32.cont [13/16] %v1039, 128
        %1355 = vxpose.xlu0.b32.cont [14/16] %v1043, 128
        %1356 = vxpose.xlu0.b32.cont [15/16] %v1047, 128
        %1357 = vxpose.xlu0.b32.end [16/16] %v1051, 128
        %v1358 = vpop.trf.xlu0
        %v1359 = vpop.trf.xlu0
        %v1360 = vpop.trf.xlu0
        %v1361 = vpop.trf.xlu0
        %v1362 = vpop.trf.xlu0
        %v1363 = vpop.trf.xlu0
        %v1364 = vpop.trf.xlu0
        %v1365 = vpop.trf.xlu0
        %v1366 = vpop.trf.xlu0
        %v1367 = vpop.trf.xlu0
        %v1368 = vpop.trf.xlu0
        %v1369 = vpop.trf.xlu0
        %v1370 = vpop.trf.xlu0
        %v1371 = vpop.trf.xlu0
        %v1372 = vpop.trf.xlu0
        %v1373 = vpop.trf.xlu0
        %1374 = vxpose.xlu0.b32.start [1/16] %v992, 128
        %1375 = vxpose.xlu0.b32.cont [2/16] %v996, 128
        %1376 = vxpose.xlu0.b32.cont [3/16] %v1000, 128
        %1377 = vxpose.xlu0.b32.cont [4/16] %v1004, 128
        %1378 = vxpose.xlu0.b32.cont [5/16] %v1008, 128
        %1379 = vxpose.xlu0.b32.cont [6/16] %v1012, 128
        %1380 = vxpose.xlu0.b32.cont [7/16] %v1016, 128
        %1381 = vxpose.xlu0.b32.cont [8/16] %v1020, 128
        %1382 = vxpose.xlu0.b32.cont [9/16] %v1024, 128
        %1383 = vxpose.xlu0.b32.cont [10/16] %v1028, 128
        %1384 = vxpose.xlu0.b32.cont [11/16] %v1032, 128
        %1385 = vxpose.xlu0.b32.cont [12/16] %v1036, 128
        %1386 = vxpose.xlu0.b32.cont [13/16] %v1040, 128
        %1387 = vxpose.xlu0.b32.cont [14/16] %v1044, 128
        %1388 = vxpose.xlu0.b32.cont [15/16] %v1048, 128
        %1389 = vxpose.xlu0.b32.end [16/16] %v1052, 128
        %v1390 = vpop.trf.xlu0
        %v1391 = vpop.trf.xlu0
        %v1392 = vpop.trf.xlu0
        %v1393 = vpop.trf.xlu0
        %v1394 = vpop.trf.xlu0
        %v1395 = vpop.trf.xlu0
        %v1396 = vpop.trf.xlu0
        %v1397 = vpop.trf.xlu0
        %v1398 = vpop.trf.xlu0
        %v1399 = vpop.trf.xlu0
        %v1400 = vpop.trf.xlu0
        %v1401 = vpop.trf.xlu0
        %v1402 = vpop.trf.xlu0
        %v1403 = vpop.trf.xlu0
        %v1404 = vpop.trf.xlu0
        %v1405 = vpop.trf.xlu0
        %1406 = vxpose.xlu0.b32.start [1/16] %v993, 128
        %1407 = vxpose.xlu0.b32.cont [2/16] %v997, 128
        %1408 = vxpose.xlu0.b32.cont [3/16] %v1001, 128
        %1409 = vxpose.xlu0.b32.cont [4/16] %v1005, 128
        %1410 = vxpose.xlu0.b32.cont [5/16] %v1009, 128
        %1411 = vxpose.xlu0.b32.cont [6/16] %v1013, 128
        %1412 = vxpose.xlu0.b32.cont [7/16] %v1017, 128
        %1413 = vxpose.xlu0.b32.cont [8/16] %v1021, 128
        %1414 = vxpose.xlu0.b32.cont [9/16] %v1025, 128
        %1415 = vxpose.xlu0.b32.cont [10/16] %v1029, 128
        %1416 = vxpose.xlu0.b32.cont [11/16] %v1033, 128
        %1417 = vxpose.xlu0.b32.cont [12/16] %v1037, 128
        %1418 = vxpose.xlu0.b32.cont [13/16] %v1041, 128
        %1419 = vxpose.xlu0.b32.cont [14/16] %v1045, 128
        %1420 = vxpose.xlu0.b32.cont [15/16] %v1049, 128
        %1421 = vxpose.xlu0.b32.end [16/16] %v1053, 128
        %v1422 = vpop.trf.xlu0
        %v1423 = vpop.trf.xlu0
        %v1424 = vpop.trf.xlu0
        %v1425 = vpop.trf.xlu0
        %v1426 = vpop.trf.xlu0
        %v1427 = vpop.trf.xlu0
        %v1428 = vpop.trf.xlu0
        %v1429 = vpop.trf.xlu0
        %v1430 = vpop.trf.xlu0
        %v1431 = vpop.trf.xlu0
        %v1432 = vpop.trf.xlu0
        %v1433 = vpop.trf.xlu0
        %v1434 = vpop.trf.xlu0
        %v1435 = vpop.trf.xlu0
        %v1436 = vpop.trf.xlu0
        %v1437 = vpop.trf.xlu0
        %1438 = vxpose.xlu0.b32.start [1/16] %v1054, 128
        %1439 = vxpose.xlu0.b32.cont [2/16] %v1058, 128
        %1440 = vxpose.xlu0.b32.cont [3/16] %v1062, 128
        %1441 = vxpose.xlu0.b32.cont [4/16] %v1066, 128
        %1442 = vxpose.xlu0.b32.cont [5/16] %v1070, 128
        %1443 = vxpose.xlu0.b32.cont [6/16] %v1074, 128
        %1444 = vxpose.xlu0.b32.cont [7/16] %v1078, 128
        %1445 = vxpose.xlu0.b32.cont [8/16] %v1082, 128
        %1446 = vxpose.xlu0.b32.cont [9/16] %v1086, 128
        %1447 = vxpose.xlu0.b32.cont [10/16] %v1090, 128
        %1448 = vxpose.xlu0.b32.cont [11/16] %v1094, 128
        %1449 = vxpose.xlu0.b32.cont [12/16] %v1098, 128
        %1450 = vxpose.xlu0.b32.cont [13/16] %v1102, 128
        %1451 = vxpose.xlu0.b32.cont [14/16] %v1106, 128
        %1452 = vxpose.xlu0.b32.cont [15/16] %v1110, 128
        %1453 = vxpose.xlu0.b32.end [16/16] %v1114, 128
        %v1454 = vpop.trf.xlu0
        %v1455 = vpop.trf.xlu0
        %v1456 = vpop.trf.xlu0
        %v1457 = vpop.trf.xlu0
        %v1458 = vpop.trf.xlu0
        %v1459 = vpop.trf.xlu0
        %v1460 = vpop.trf.xlu0
        %v1461 = vpop.trf.xlu0
        %v1462 = vpop.trf.xlu0
        %v1463 = vpop.trf.xlu0
        %v1464 = vpop.trf.xlu0
        %v1465 = vpop.trf.xlu0
        %v1466 = vpop.trf.xlu0
        %v1467 = vpop.trf.xlu0
        %v1468 = vpop.trf.xlu0
        %v1469 = vpop.trf.xlu0
        %1470 = vxpose.xlu0.b32.start [1/16] %v1055, 128
        %1471 = vxpose.xlu0.b32.cont [2/16] %v1059, 128
        %1472 = vxpose.xlu0.b32.cont [3/16] %v1063, 128
        %1473 = vxpose.xlu0.b32.cont [4/16] %v1067, 128
        %1474 = vxpose.xlu0.b32.cont [5/16] %v1071, 128
        %1475 = vxpose.xlu0.b32.cont [6/16] %v1075, 128
        %1476 = vxpose.xlu0.b32.cont [7/16] %v1079, 128
        %1477 = vxpose.xlu0.b32.cont [8/16] %v1083, 128
        %1478 = vxpose.xlu0.b32.cont [9/16] %v1087, 128
        %1479 = vxpose.xlu0.b32.cont [10/16] %v1091, 128
        %1480 = vxpose.xlu0.b32.cont [11/16] %v1095, 128
        %1481 = vxpose.xlu0.b32.cont [12/16] %v1099, 128
        %1482 = vxpose.xlu0.b32.cont [13/16] %v1103, 128
        %1483 = vxpose.xlu0.b32.cont [14/16] %v1107, 128
        %1484 = vxpose.xlu0.b32.cont [15/16] %v1111, 128
        %1485 = vxpose.xlu0.b32.end [16/16] %v1115, 128
        %v1486 = vpop.trf.xlu0
        %v1487 = vpop.trf.xlu0
        %v1488 = vpop.trf.xlu0
        %v1489 = vpop.trf.xlu0
        %v1490 = vpop.trf.xlu0
        %v1491 = vpop.trf.xlu0
        %v1492 = vpop.trf.xlu0
        %v1493 = vpop.trf.xlu0
        %v1494 = vpop.trf.xlu0
        %v1495 = vpop.trf.xlu0
        %v1496 = vpop.trf.xlu0
        %v1497 = vpop.trf.xlu0
        %v1498 = vpop.trf.xlu0
        %v1499 = vpop.trf.xlu0
        %v1500 = vpop.trf.xlu0
        %v1501 = vpop.trf.xlu0
        %1502 = vxpose.xlu0.b32.start [1/16] %v1056, 128
        %1503 = vxpose.xlu0.b32.cont [2/16] %v1060, 128
        %1504 = vxpose.xlu0.b32.cont [3/16] %v1064, 128
        %1505 = vxpose.xlu0.b32.cont [4/16] %v1068, 128
        %1506 = vxpose.xlu0.b32.cont [5/16] %v1072, 128
        %1507 = vxpose.xlu0.b32.cont [6/16] %v1076, 128
        %1508 = vxpose.xlu0.b32.cont [7/16] %v1080, 128
        %1509 = vxpose.xlu0.b32.cont [8/16] %v1084, 128
        %1510 = vxpose.xlu0.b32.cont [9/16] %v1088, 128
        %1511 = vxpose.xlu0.b32.cont [10/16] %v1092, 128
        %1512 = vxpose.xlu0.b32.cont [11/16] %v1096, 128
        %1513 = vxpose.xlu0.b32.cont [12/16] %v1100, 128
        %1514 = vxpose.xlu0.b32.cont [13/16] %v1104, 128
        %1515 = vxpose.xlu0.b32.cont [14/16] %v1108, 128
        %1516 = vxpose.xlu0.b32.cont [15/16] %v1112, 128
        %1517 = vxpose.xlu0.b32.end [16/16] %v1116, 128
        %v1518 = vpop.trf.xlu0
        %v1519 = vpop.trf.xlu0
        %v1520 = vpop.trf.xlu0
        %v1521 = vpop.trf.xlu0
        %v1522 = vpop.trf.xlu0
        %v1523 = vpop.trf.xlu0
        %v1524 = vpop.trf.xlu0
        %v1525 = vpop.trf.xlu0
        %v1526 = vpop.trf.xlu0
        %v1527 = vpop.trf.xlu0
        %v1528 = vpop.trf.xlu0
        %v1529 = vpop.trf.xlu0
        %v1530 = vpop.trf.xlu0
        %v1531 = vpop.trf.xlu0
        %v1532 = vpop.trf.xlu0
        %v1533 = vpop.trf.xlu0
        %1534 = vxpose.xlu0.b32.start [1/16] %v1057, 128
        %1535 = vxpose.xlu0.b32.cont [2/16] %v1061, 128
        %1536 = vxpose.xlu0.b32.cont [3/16] %v1065, 128
        %1537 = vxpose.xlu0.b32.cont [4/16] %v1069, 128
        %1538 = vxpose.xlu0.b32.cont [5/16] %v1073, 128
        %1539 = vxpose.xlu0.b32.cont [6/16] %v1077, 128
        %1540 = vxpose.xlu0.b32.cont [7/16] %v1081, 128
        %1541 = vxpose.xlu0.b32.cont [8/16] %v1085, 128
        %1542 = vxpose.xlu0.b32.cont [9/16] %v1089, 128
        %1543 = vxpose.xlu0.b32.cont [10/16] %v1093, 128
        %1544 = vxpose.xlu0.b32.cont [11/16] %v1097, 128
        %1545 = vxpose.xlu0.b32.cont [12/16] %v1101, 128
        %1546 = vxpose.xlu0.b32.cont [13/16] %v1105, 128
        %1547 = vxpose.xlu0.b32.cont [14/16] %v1109, 128
        %1548 = vxpose.xlu0.b32.cont [15/16] %v1113, 128
        %1549 = vxpose.xlu0.b32.end [16/16] %v1117, 128
        %v1550 = vpop.trf.xlu0
        %v1551 = vpop.trf.xlu0
        %v1552 = vpop.trf.xlu0
        %v1553 = vpop.trf.xlu0
        %v1554 = vpop.trf.xlu0
        %v1555 = vpop.trf.xlu0
        %v1556 = vpop.trf.xlu0
        %v1557 = vpop.trf.xlu0
        %v1558 = vpop.trf.xlu0
        %v1559 = vpop.trf.xlu0
        %v1560 = vpop.trf.xlu0
        %v1561 = vpop.trf.xlu0
        %v1562 = vpop.trf.xlu0
        %v1563 = vpop.trf.xlu0
        %v1564 = vpop.trf.xlu0
        %v1565 = vpop.trf.xlu0
        %1566 = vxpose.xlu0.b32.start [1/16] %v1118, 128
        %1567 = vxpose.xlu0.b32.cont [2/16] %v1122, 128
        %1568 = vxpose.xlu0.b32.cont [3/16] %v1126, 128
        %1569 = vxpose.xlu0.b32.cont [4/16] %v1130, 128
        %1570 = vxpose.xlu0.b32.cont [5/16] %v1134, 128
        %1571 = vxpose.xlu0.b32.cont [6/16] %v1138, 128
        %1572 = vxpose.xlu0.b32.cont [7/16] %v1142, 128
        %1573 = vxpose.xlu0.b32.cont [8/16] %v1146, 128
        %1574 = vxpose.xlu0.b32.cont [9/16] %v1150, 128
        %1575 = vxpose.xlu0.b32.cont [10/16] %v1154, 128
        %1576 = vxpose.xlu0.b32.cont [11/16] %v1158, 128
        %1577 = vxpose.xlu0.b32.cont [12/16] %v1162, 128
        %1578 = vxpose.xlu0.b32.cont [13/16] %v1166, 128
        %1579 = vxpose.xlu0.b32.cont [14/16] %v1170, 128
        %1580 = vxpose.xlu0.b32.cont [15/16] %v1174, 128
        %1581 = vxpose.xlu0.b32.end [16/16] %v1178, 128
        %v1582 = vpop.trf.xlu0
        %v1583 = vpop.trf.xlu0
        %v1584 = vpop.trf.xlu0
        %v1585 = vpop.trf.xlu0
        %v1586 = vpop.trf.xlu0
        %v1587 = vpop.trf.xlu0
        %v1588 = vpop.trf.xlu0
        %v1589 = vpop.trf.xlu0
        %v1590 = vpop.trf.xlu0
        %v1591 = vpop.trf.xlu0
        %v1592 = vpop.trf.xlu0
        %v1593 = vpop.trf.xlu0
        %v1594 = vpop.trf.xlu0
        %v1595 = vpop.trf.xlu0
        %v1596 = vpop.trf.xlu0
        %v1597 = vpop.trf.xlu0
        %1598 = vxpose.xlu0.b32.start [1/16] %v1119, 128
        %1599 = vxpose.xlu0.b32.cont [2/16] %v1123, 128
        %1600 = vxpose.xlu0.b32.cont [3/16] %v1127, 128
        %1601 = vxpose.xlu0.b32.cont [4/16] %v1131, 128
        %1602 = vxpose.xlu0.b32.cont [5/16] %v1135, 128
        %1603 = vxpose.xlu0.b32.cont [6/16] %v1139, 128
        %1604 = vxpose.xlu0.b32.cont [7/16] %v1143, 128
        %1605 = vxpose.xlu0.b32.cont [8/16] %v1147, 128
        %1606 = vxpose.xlu0.b32.cont [9/16] %v1151, 128
        %1607 = vxpose.xlu0.b32.cont [10/16] %v1155, 128
        %1608 = vxpose.xlu0.b32.cont [11/16] %v1159, 128
        %1609 = vxpose.xlu0.b32.cont [12/16] %v1163, 128
        %1610 = vxpose.xlu0.b32.cont [13/16] %v1167, 128
        %1611 = vxpose.xlu0.b32.cont [14/16] %v1171, 128
        %1612 = vxpose.xlu0.b32.cont [15/16] %v1175, 128
        %1613 = vxpose.xlu0.b32.end [16/16] %v1179, 128
        %v1614 = vpop.trf.xlu0
        %v1615 = vpop.trf.xlu0
        %v1616 = vpop.trf.xlu0
        %v1617 = vpop.trf.xlu0
        %v1618 = vpop.trf.xlu0
        %v1619 = vpop.trf.xlu0
        %v1620 = vpop.trf.xlu0
        %v1621 = vpop.trf.xlu0
        %v1622 = vpop.trf.xlu0
        %v1623 = vpop.trf.xlu0
        %v1624 = vpop.trf.xlu0
        %v1625 = vpop.trf.xlu0
        %v1626 = vpop.trf.xlu0
        %v1627 = vpop.trf.xlu0
        %v1628 = vpop.trf.xlu0
        %v1629 = vpop.trf.xlu0
        %1630 = vxpose.xlu0.b32.start [1/16] %v1120, 128
        %1631 = vxpose.xlu0.b32.cont [2/16] %v1124, 128
        %1632 = vxpose.xlu0.b32.cont [3/16] %v1128, 128
        %1633 = vxpose.xlu0.b32.cont [4/16] %v1132, 128
        %1634 = vxpose.xlu0.b32.cont [5/16] %v1136, 128
        %1635 = vxpose.xlu0.b32.cont [6/16] %v1140, 128
        %1636 = vxpose.xlu0.b32.cont [7/16] %v1144, 128
        %1637 = vxpose.xlu0.b32.cont [8/16] %v1148, 128
        %1638 = vxpose.xlu0.b32.cont [9/16] %v1152, 128
        %1639 = vxpose.xlu0.b32.cont [10/16] %v1156, 128
        %1640 = vxpose.xlu0.b32.cont [11/16] %v1160, 128
        %1641 = vxpose.xlu0.b32.cont [12/16] %v1164, 128
        %1642 = vxpose.xlu0.b32.cont [13/16] %v1168, 128
        %1643 = vxpose.xlu0.b32.cont [14/16] %v1172, 128
        %1644 = vxpose.xlu0.b32.cont [15/16] %v1176, 128
        %1645 = vxpose.xlu0.b32.end [16/16] %v1180, 128
        %v1646 = vpop.trf.xlu0
        %v1647 = vpop.trf.xlu0
        %v1648 = vpop.trf.xlu0
        %v1649 = vpop.trf.xlu0
        %v1650 = vpop.trf.xlu0
        %v1651 = vpop.trf.xlu0
        %v1652 = vpop.trf.xlu0
        %v1653 = vpop.trf.xlu0
        %v1654 = vpop.trf.xlu0
        %v1655 = vpop.trf.xlu0
        %v1656 = vpop.trf.xlu0
        %v1657 = vpop.trf.xlu0
        %v1658 = vpop.trf.xlu0
        %v1659 = vpop.trf.xlu0
        %v1660 = vpop.trf.xlu0
        %v1661 = vpop.trf.xlu0
        %1662 = vxpose.xlu0.b32.start [1/16] %v1121, 128
        %1663 = vxpose.xlu0.b32.cont [2/16] %v1125, 128
        %1664 = vxpose.xlu0.b32.cont [3/16] %v1129, 128
        %1665 = vxpose.xlu0.b32.cont [4/16] %v1133, 128
        %1666 = vxpose.xlu0.b32.cont [5/16] %v1137, 128
        %1667 = vxpose.xlu0.b32.cont [6/16] %v1141, 128
        %1668 = vxpose.xlu0.b32.cont [7/16] %v1145, 128
        %1669 = vxpose.xlu0.b32.cont [8/16] %v1149, 128
        %1670 = vxpose.xlu0.b32.cont [9/16] %v1153, 128
        %1671 = vxpose.xlu0.b32.cont [10/16] %v1157, 128
        %1672 = vxpose.xlu0.b32.cont [11/16] %v1161, 128
        %1673 = vxpose.xlu0.b32.cont [12/16] %v1165, 128
        %1674 = vxpose.xlu0.b32.cont [13/16] %v1169, 128
        %1675 = vxpose.xlu0.b32.cont [14/16] %v1173, 128
        %1676 = vxpose.xlu0.b32.cont [15/16] %v1177, 128
        %1677 = vxpose.xlu0.b32.end [16/16] %v1181, 128
        %v1678 = vpop.trf.xlu0
        %v1679 = vpop.trf.xlu0
        %v1680 = vpop.trf.xlu0
        %v1681 = vpop.trf.xlu0
        %v1682 = vpop.trf.xlu0
        %v1683 = vpop.trf.xlu0
        %v1684 = vpop.trf.xlu0
        %v1685 = vpop.trf.xlu0
        %v1686 = vpop.trf.xlu0
        %v1687 = vpop.trf.xlu0
        %v1688 = vpop.trf.xlu0
        %v1689 = vpop.trf.xlu0
        %v1690 = vpop.trf.xlu0
        %v1691 = vpop.trf.xlu0
        %v1692 = vpop.trf.xlu0
        %v1693 = vpop.trf.xlu0
        %1694 = vst [vmem:[%s153] sm:$0xff] %v1198
        %1695 = vst [vmem:[%s153 + $0x8] sm:$0xff] %v1326
        %1696 = vst [vmem:[%s153 + $0x10] sm:$0xff] %v1454
        %1697 = vst [vmem:[%s153 + $0x18] sm:$0xff] %v1582
        %1698 = vst [vmem:[%s153 + $0x20] sm:$0xff] %v1199
        %1699 = vst [vmem:[%s153 + $0x28] sm:$0xff] %v1327
        %1700 = vst [vmem:[%s153 + $0x30] sm:$0xff] %v1455
        %1701 = vst [vmem:[%s153 + $0x38] sm:$0xff] %v1583
        %1702 = vst [vmem:[%s153 + $0x40] sm:$0xff] %v1200
        %1703 = vst [vmem:[%s153 + $0x48] sm:$0xff] %v1328
        %1704 = vst [vmem:[%s153 + $0x50] sm:$0xff] %v1456
        %1705 = vst [vmem:[%s153 + $0x58] sm:$0xff] %v1584
        %1706 = vst [vmem:[%s153 + $0x60] sm:$0xff] %v1201
        %1707 = vst [vmem:[%s153 + $0x68] sm:$0xff] %v1329
        %1708 = vst [vmem:[%s153 + $0x70] sm:$0xff] %v1457
        %1709 = vst [vmem:[%s153 + $0x78] sm:$0xff] %v1585
        %1710 = vst [vmem:[%s153 + $0x80] sm:$0xff] %v1202
        %1711 = vst [vmem:[%s153 + $0x88] sm:$0xff] %v1330
        %1712 = vst [vmem:[%s153 + $0x90] sm:$0xff] %v1458
        %1713 = vst [vmem:[%s153 + $0x98] sm:$0xff] %v1586
        %1714 = vst [vmem:[%s153 + $0xa0] sm:$0xff] %v1203
        %1715 = vst [vmem:[%s153 + $0xa8] sm:$0xff] %v1331
        %1716 = vst [vmem:[%s153 + $0xb0] sm:$0xff] %v1459
        %1717 = vst [vmem:[%s153 + $0xb8] sm:$0xff] %v1587
        %1718 = vst [vmem:[%s153 + $0xc0] sm:$0xff] %v1204
        %1719 = vst [vmem:[%s153 + $0xc8] sm:$0xff] %v1332
        %1720 = vst [vmem:[%s153 + $0xd0] sm:$0xff] %v1460
        %1721 = vst [vmem:[%s153 + $0xd8] sm:$0xff] %v1588
        %1722 = vst [vmem:[%s153 + $0xe0] sm:$0xff] %v1205
        %1723 = vst [vmem:[%s153 + $0xe8] sm:$0xff] %v1333
        %1724 = vst [vmem:[%s153 + $0xf0] sm:$0xff] %v1461
        %1725 = vst [vmem:[%s153 + $0xf8] sm:$0xff] %v1589
        %1726 = vst [vmem:[%s153 + $0x100] sm:$0xff] %v1206
        %1727 = vst [vmem:[%s153 + $0x108] sm:$0xff] %v1334
        %1728 = vst [vmem:[%s153 + $0x110] sm:$0xff] %v1462
        %1729 = vst [vmem:[%s153 + $0x118] sm:$0xff] %v1590
        %1730 = vst [vmem:[%s153 + $0x120] sm:$0xff] %v1207
        %1731 = vst [vmem:[%s153 + $0x128] sm:$0xff] %v1335
        %1732 = vst [vmem:[%s153 + $0x130] sm:$0xff] %v1463
        %1733 = vst [vmem:[%s153 + $0x138] sm:$0xff] %v1591
        %1734 = vst [vmem:[%s153 + $0x140] sm:$0xff] %v1208
        %1735 = vst [vmem:[%s153 + $0x148] sm:$0xff] %v1336
        %1736 = vst [vmem:[%s153 + $0x150] sm:$0xff] %v1464
        %1737 = vst [vmem:[%s153 + $0x158] sm:$0xff] %v1592
        %1738 = vst [vmem:[%s153 + $0x160] sm:$0xff] %v1209
        %1739 = vst [vmem:[%s153 + $0x168] sm:$0xff] %v1337
        %1740 = vst [vmem:[%s153 + $0x170] sm:$0xff] %v1465
        %1741 = vst [vmem:[%s153 + $0x178] sm:$0xff] %v1593
        %1742 = vst [vmem:[%s153 + $0x180] sm:$0xff] %v1210
        %1743 = vst [vmem:[%s153 + $0x188] sm:$0xff] %v1338
        %1744 = vst [vmem:[%s153 + $0x190] sm:$0xff] %v1466
        %1745 = vst [vmem:[%s153 + $0x198] sm:$0xff] %v1594
        %1746 = vst [vmem:[%s153 + $0x1a0] sm:$0xff] %v1211
        %1747 = vst [vmem:[%s153 + $0x1a8] sm:$0xff] %v1339
        %1748 = vst [vmem:[%s153 + $0x1b0] sm:$0xff] %v1467
        %1749 = vst [vmem:[%s153 + $0x1b8] sm:$0xff] %v1595
        %1750 = vst [vmem:[%s153 + $0x1c0] sm:$0xff] %v1212
        %1751 = vst [vmem:[%s153 + $0x1c8] sm:$0xff] %v1340
        %1752 = vst [vmem:[%s153 + $0x1d0] sm:$0xff] %v1468
        %1753 = vst [vmem:[%s153 + $0x1d8] sm:$0xff] %v1596
        %1754 = vst [vmem:[%s153 + $0x1e0] sm:$0xff] %v1213
        %1755 = vst [vmem:[%s153 + $0x1e8] sm:$0xff] %v1341
        %1756 = vst [vmem:[%s153 + $0x1f0] sm:$0xff] %v1469
        %1757 = vst [vmem:[%s153 + $0x1f8] sm:$0xff] %v1597
        %1758 = vst [vmem:[%s153 + $0x200] sm:$0xff] %v1230
        %1759 = vst [vmem:[%s153 + $0x208] sm:$0xff] %v1358
        %1760 = vst [vmem:[%s153 + $0x210] sm:$0xff] %v1486
        %1761 = vst [vmem:[%s153 + $0x218] sm:$0xff] %v1614
        %1762 = vst [vmem:[%s153 + $0x220] sm:$0xff] %v1231
        %1763 = vst [vmem:[%s153 + $0x228] sm:$0xff] %v1359
        %1764 = vst [vmem:[%s153 + $0x230] sm:$0xff] %v1487
        %1765 = vst [vmem:[%s153 + $0x238] sm:$0xff] %v1615
        %1766 = vst [vmem:[%s153 + $0x240] sm:$0xff] %v1232
        %1767 = vst [vmem:[%s153 + $0x248] sm:$0xff] %v1360
        %1768 = vst [vmem:[%s153 + $0x250] sm:$0xff] %v1488
        %1769 = vst [vmem:[%s153 + $0x258] sm:$0xff] %v1616
        %1770 = vst [vmem:[%s153 + $0x260] sm:$0xff] %v1233
        %1771 = vst [vmem:[%s153 + $0x268] sm:$0xff] %v1361
        %1772 = vst [vmem:[%s153 + $0x270] sm:$0xff] %v1489
        %1773 = vst [vmem:[%s153 + $0x278] sm:$0xff] %v1617
        %1774 = vst [vmem:[%s153 + $0x280] sm:$0xff] %v1234
        %1775 = vst [vmem:[%s153 + $0x288] sm:$0xff] %v1362
        %1776 = vst [vmem:[%s153 + $0x290] sm:$0xff] %v1490
        %1777 = vst [vmem:[%s153 + $0x298] sm:$0xff] %v1618
        %1778 = vst [vmem:[%s153 + $0x2a0] sm:$0xff] %v1235
        %1779 = vst [vmem:[%s153 + $0x2a8] sm:$0xff] %v1363
        %1780 = vst [vmem:[%s153 + $0x2b0] sm:$0xff] %v1491
        %1781 = vst [vmem:[%s153 + $0x2b8] sm:$0xff] %v1619
        %1782 = vst [vmem:[%s153 + $0x2c0] sm:$0xff] %v1236
        %1783 = vst [vmem:[%s153 + $0x2c8] sm:$0xff] %v1364
        %1784 = vst [vmem:[%s153 + $0x2d0] sm:$0xff] %v1492
        %1785 = vst [vmem:[%s153 + $0x2d8] sm:$0xff] %v1620
        %1786 = vst [vmem:[%s153 + $0x2e0] sm:$0xff] %v1237
        %1787 = vst [vmem:[%s153 + $0x2e8] sm:$0xff] %v1365
        %1788 = vst [vmem:[%s153 + $0x2f0] sm:$0xff] %v1493
        %1789 = vst [vmem:[%s153 + $0x2f8] sm:$0xff] %v1621
        %1790 = vst [vmem:[%s153 + $0x300] sm:$0xff] %v1238
        %1791 = vst [vmem:[%s153 + $0x308] sm:$0xff] %v1366
        %1792 = vst [vmem:[%s153 + $0x310] sm:$0xff] %v1494
        %1793 = vst [vmem:[%s153 + $0x318] sm:$0xff] %v1622
        %1794 = vst [vmem:[%s153 + $0x320] sm:$0xff] %v1239
        %1795 = vst [vmem:[%s153 + $0x328] sm:$0xff] %v1367
        %1796 = vst [vmem:[%s153 + $0x330] sm:$0xff] %v1495
        %1797 = vst [vmem:[%s153 + $0x338] sm:$0xff] %v1623
        %1798 = vst [vmem:[%s153 + $0x340] sm:$0xff] %v1240
        %1799 = vst [vmem:[%s153 + $0x348] sm:$0xff] %v1368
        %1800 = vst [vmem:[%s153 + $0x350] sm:$0xff] %v1496
        %1801 = vst [vmem:[%s153 + $0x358] sm:$0xff] %v1624
        %1802 = vst [vmem:[%s153 + $0x360] sm:$0xff] %v1241
        %1803 = vst [vmem:[%s153 + $0x368] sm:$0xff] %v1369
        %1804 = vst [vmem:[%s153 + $0x370] sm:$0xff] %v1497
        %1805 = vst [vmem:[%s153 + $0x378] sm:$0xff] %v1625
        %1806 = vst [vmem:[%s153 + $0x380] sm:$0xff] %v1242
        %1807 = vst [vmem:[%s153 + $0x388] sm:$0xff] %v1370
        %1808 = vst [vmem:[%s153 + $0x390] sm:$0xff] %v1498
        %1809 = vst [vmem:[%s153 + $0x398] sm:$0xff] %v1626
        %1810 = vst [vmem:[%s153 + $0x3a0] sm:$0xff] %v1243
        %1811 = vst [vmem:[%s153 + $0x3a8] sm:$0xff] %v1371
        %1812 = vst [vmem:[%s153 + $0x3b0] sm:$0xff] %v1499
        %1813 = vst [vmem:[%s153 + $0x3b8] sm:$0xff] %v1627
        %1814 = vst [vmem:[%s153 + $0x3c0] sm:$0xff] %v1244
        %1815 = vst [vmem:[%s153 + $0x3c8] sm:$0xff] %v1372
        %1816 = vst [vmem:[%s153 + $0x3d0] sm:$0xff] %v1500
        %1817 = vst [vmem:[%s153 + $0x3d8] sm:$0xff] %v1628
        %1818 = vst [vmem:[%s153 + $0x3e0] sm:$0xff] %v1245
        %1819 = vst [vmem:[%s153 + $0x3e8] sm:$0xff] %v1373
        %1820 = vst [vmem:[%s153 + $0x3f0] sm:$0xff] %v1501
        %1821 = vst [vmem:[%s153 + $0x3f8] sm:$0xff] %v1629
        %1822 = vst [vmem:[%s153 + $0x400] sm:$0xff] %v1262
        %1823 = vst [vmem:[%s153 + $0x408] sm:$0xff] %v1390
        %1824 = vst [vmem:[%s153 + $0x410] sm:$0xff] %v1518
        %1825 = vst [vmem:[%s153 + $0x418] sm:$0xff] %v1646
        %1826 = vst [vmem:[%s153 + $0x420] sm:$0xff] %v1263
        %1827 = vst [vmem:[%s153 + $0x428] sm:$0xff] %v1391
        %1828 = vst [vmem:[%s153 + $0x430] sm:$0xff] %v1519
        %1829 = vst [vmem:[%s153 + $0x438] sm:$0xff] %v1647
        %1830 = vst [vmem:[%s153 + $0x440] sm:$0xff] %v1264
        %1831 = vst [vmem:[%s153 + $0x448] sm:$0xff] %v1392
        %1832 = vst [vmem:[%s153 + $0x450] sm:$0xff] %v1520
        %1833 = vst [vmem:[%s153 + $0x458] sm:$0xff] %v1648
        %1834 = vst [vmem:[%s153 + $0x460] sm:$0xff] %v1265
        %1835 = vst [vmem:[%s153 + $0x468] sm:$0xff] %v1393
        %1836 = vst [vmem:[%s153 + $0x470] sm:$0xff] %v1521
        %1837 = vst [vmem:[%s153 + $0x478] sm:$0xff] %v1649
        %1838 = vst [vmem:[%s153 + $0x480] sm:$0xff] %v1266
        %1839 = vst [vmem:[%s153 + $0x488] sm:$0xff] %v1394
        %1840 = vst [vmem:[%s153 + $0x490] sm:$0xff] %v1522
        %1841 = vst [vmem:[%s153 + $0x498] sm:$0xff] %v1650
        %1842 = vst [vmem:[%s153 + $0x4a0] sm:$0xff] %v1267
        %1843 = vst [vmem:[%s153 + $0x4a8] sm:$0xff] %v1395
        %1844 = vst [vmem:[%s153 + $0x4b0] sm:$0xff] %v1523
        %1845 = vst [vmem:[%s153 + $0x4b8] sm:$0xff] %v1651
        %1846 = vst [vmem:[%s153 + $0x4c0] sm:$0xff] %v1268
        %1847 = vst [vmem:[%s153 + $0x4c8] sm:$0xff] %v1396
        %1848 = vst [vmem:[%s153 + $0x4d0] sm:$0xff] %v1524
        %1849 = vst [vmem:[%s153 + $0x4d8] sm:$0xff] %v1652
        %1850 = vst [vmem:[%s153 + $0x4e0] sm:$0xff] %v1269
        %1851 = vst [vmem:[%s153 + $0x4e8] sm:$0xff] %v1397
        %1852 = vst [vmem:[%s153 + $0x4f0] sm:$0xff] %v1525
        %1853 = vst [vmem:[%s153 + $0x4f8] sm:$0xff] %v1653
        %1854 = vst [vmem:[%s153 + $0x500] sm:$0xff] %v1270
        %1855 = vst [vmem:[%s153 + $0x508] sm:$0xff] %v1398
        %1856 = vst [vmem:[%s153 + $0x510] sm:$0xff] %v1526
        %1857 = vst [vmem:[%s153 + $0x518] sm:$0xff] %v1654
        %1858 = vst [vmem:[%s153 + $0x520] sm:$0xff] %v1271
        %1859 = vst [vmem:[%s153 + $0x528] sm:$0xff] %v1399
        %1860 = vst [vmem:[%s153 + $0x530] sm:$0xff] %v1527
        %1861 = vst [vmem:[%s153 + $0x538] sm:$0xff] %v1655
        %1862 = vst [vmem:[%s153 + $0x540] sm:$0xff] %v1272
        %1863 = vst [vmem:[%s153 + $0x548] sm:$0xff] %v1400
        %1864 = vst [vmem:[%s153 + $0x550] sm:$0xff] %v1528
        %1865 = vst [vmem:[%s153 + $0x558] sm:$0xff] %v1656
        %1866 = vst [vmem:[%s153 + $0x560] sm:$0xff] %v1273
        %1867 = vst [vmem:[%s153 + $0x568] sm:$0xff] %v1401
        %1868 = vst [vmem:[%s153 + $0x570] sm:$0xff] %v1529
        %1869 = vst [vmem:[%s153 + $0x578] sm:$0xff] %v1657
        %1870 = vst [vmem:[%s153 + $0x580] sm:$0xff] %v1274
        %1871 = vst [vmem:[%s153 + $0x588] sm:$0xff] %v1402
        %1872 = vst [vmem:[%s153 + $0x590] sm:$0xff] %v1530
        %1873 = vst [vmem:[%s153 + $0x598] sm:$0xff] %v1658
        %1874 = vst [vmem:[%s153 + $0x5a0] sm:$0xff] %v1275
        %1875 = vst [vmem:[%s153 + $0x5a8] sm:$0xff] %v1403
        %1876 = vst [vmem:[%s153 + $0x5b0] sm:$0xff] %v1531
        %1877 = vst [vmem:[%s153 + $0x5b8] sm:$0xff] %v1659
        %1878 = vst [vmem:[%s153 + $0x5c0] sm:$0xff] %v1276
        %1879 = vst [vmem:[%s153 + $0x5c8] sm:$0xff] %v1404
        %1880 = vst [vmem:[%s153 + $0x5d0] sm:$0xff] %v1532
        %1881 = vst [vmem:[%s153 + $0x5d8] sm:$0xff] %v1660
        %1882 = vst [vmem:[%s153 + $0x5e0] sm:$0xff] %v1277
        %1883 = vst [vmem:[%s153 + $0x5e8] sm:$0xff] %v1405
        %1884 = vst [vmem:[%s153 + $0x5f0] sm:$0xff] %v1533
        %1885 = vst [vmem:[%s153 + $0x5f8] sm:$0xff] %v1661
        %1886 = vst [vmem:[%s153 + $0x600] sm:$0xff] %v1294
        %1887 = vst [vmem:[%s153 + $0x608] sm:$0xff] %v1422
        %1888 = vst [vmem:[%s153 + $0x610] sm:$0xff] %v1550
        %1889 = vst [vmem:[%s153 + $0x618] sm:$0xff] %v1678
        %1890 = vst [vmem:[%s153 + $0x620] sm:$0xff] %v1295
        %1891 = vst [vmem:[%s153 + $0x628] sm:$0xff] %v1423
        %1892 = vst [vmem:[%s153 + $0x630] sm:$0xff] %v1551
        %1893 = vst [vmem:[%s153 + $0x638] sm:$0xff] %v1679
        %1894 = vst [vmem:[%s153 + $0x640] sm:$0xff] %v1296
        %1895 = vst [vmem:[%s153 + $0x648] sm:$0xff] %v1424
        %1896 = vst [vmem:[%s153 + $0x650] sm:$0xff] %v1552
        %1897 = vst [vmem:[%s153 + $0x658] sm:$0xff] %v1680
        %1898 = vst [vmem:[%s153 + $0x660] sm:$0xff] %v1297
        %1899 = vst [vmem:[%s153 + $0x668] sm:$0xff] %v1425
        %1900 = vst [vmem:[%s153 + $0x670] sm:$0xff] %v1553
        %1901 = vst [vmem:[%s153 + $0x678] sm:$0xff] %v1681
        %1902 = vst [vmem:[%s153 + $0x680] sm:$0xff] %v1298
        %1903 = vst [vmem:[%s153 + $0x688] sm:$0xff] %v1426
        %1904 = vst [vmem:[%s153 + $0x690] sm:$0xff] %v1554
        %1905 = vst [vmem:[%s153 + $0x698] sm:$0xff] %v1682
        %1906 = vst [vmem:[%s153 + $0x6a0] sm:$0xff] %v1299
        %1907 = vst [vmem:[%s153 + $0x6a8] sm:$0xff] %v1427
        %1908 = vst [vmem:[%s153 + $0x6b0] sm:$0xff] %v1555
        %1909 = vst [vmem:[%s153 + $0x6b8] sm:$0xff] %v1683
        %1910 = vst [vmem:[%s153 + $0x6c0] sm:$0xff] %v1300
        %1911 = vst [vmem:[%s153 + $0x6c8] sm:$0xff] %v1428
        %1912 = vst [vmem:[%s153 + $0x6d0] sm:$0xff] %v1556
        %1913 = vst [vmem:[%s153 + $0x6d8] sm:$0xff] %v1684
        %1914 = vst [vmem:[%s153 + $0x6e0] sm:$0xff] %v1301
        %1915 = vst [vmem:[%s153 + $0x6e8] sm:$0xff] %v1429
        %1916 = vst [vmem:[%s153 + $0x6f0] sm:$0xff] %v1557
        %1917 = vst [vmem:[%s153 + $0x6f8] sm:$0xff] %v1685
        %1918 = vst [vmem:[%s153 + $0x700] sm:$0xff] %v1302
        %1919 = vst [vmem:[%s153 + $0x708] sm:$0xff] %v1430
        %1920 = vst [vmem:[%s153 + $0x710] sm:$0xff] %v1558
        %1921 = vst [vmem:[%s153 + $0x718] sm:$0xff] %v1686
        %1922 = vst [vmem:[%s153 + $0x720] sm:$0xff] %v1303
        %1923 = vst [vmem:[%s153 + $0x728] sm:$0xff] %v1431
        %1924 = vst [vmem:[%s153 + $0x730] sm:$0xff] %v1559
        %1925 = vst [vmem:[%s153 + $0x738] sm:$0xff] %v1687
        %1926 = vst [vmem:[%s153 + $0x740] sm:$0xff] %v1304
        %1927 = vst [vmem:[%s153 + $0x748] sm:$0xff] %v1432
        %1928 = vst [vmem:[%s153 + $0x750] sm:$0xff] %v1560
        %1929 = vst [vmem:[%s153 + $0x758] sm:$0xff] %v1688
        %1930 = vst [vmem:[%s153 + $0x760] sm:$0xff] %v1305
        %1931 = vst [vmem:[%s153 + $0x768] sm:$0xff] %v1433
        %1932 = vst [vmem:[%s153 + $0x770] sm:$0xff] %v1561
        %1933 = vst [vmem:[%s153 + $0x778] sm:$0xff] %v1689
        %1934 = vst [vmem:[%s153 + $0x780] sm:$0xff] %v1306
        %1935 = vst [vmem:[%s153 + $0x788] sm:$0xff] %v1434
        %1936 = vst [vmem:[%s153 + $0x790] sm:$0xff] %v1562
        %1937 = vst [vmem:[%s153 + $0x798] sm:$0xff] %v1690
        %1938 = vst [vmem:[%s153 + $0x7a0] sm:$0xff] %v1307
        %1939 = vst [vmem:[%s153 + $0x7a8] sm:$0xff] %v1435
        %1940 = vst [vmem:[%s153 + $0x7b0] sm:$0xff] %v1563
        %1941 = vst [vmem:[%s153 + $0x7b8] sm:$0xff] %v1691
        %1942 = vst [vmem:[%s153 + $0x7c0] sm:$0xff] %v1308
        %1943 = vst [vmem:[%s153 + $0x7c8] sm:$0xff] %v1436
        %1944 = vst [vmem:[%s153 + $0x7d0] sm:$0xff] %v1564
        %1945 = vst [vmem:[%s153 + $0x7d8] sm:$0xff] %v1692
        %1946 = vst [vmem:[%s153 + $0x7e0] sm:$0xff] %v1309
        %1947 = vst [vmem:[%s153 + $0x7e8] sm:$0xff] %v1437
        %1948 = vst [vmem:[%s153 + $0x7f0] sm:$0xff] %v1565
        %1949 = vst [vmem:[%s153 + $0x7f8] sm:$0xff] %v1693
        %s1950 = sand.u32 %s68, 1
        %s1951 = scalar_lea.sflag [#allocation4], %s1950
        %s1952 = sand.u32 %s68, 1
        %s1953 = smul.addr %s1952, 2048
        %s1954 = scalar_lea.vmem [#allocation5], %s1953
        // Predicated region
        $region29: #{tpu_custom_call.1} parent=23 // pred_check
          %p1955 = pneg %p78
        $region30: #{tpu_custom_call.1} parent=23 // pred_check_branch
          %1957 = sbr.rel (%p1955) target = $region32
        $region31: #{tpu_custom_call.1} parent=23 // pred_region
          %s1958 = smul.u32 64, %s23
          %s1959 = smul.u32 4, %s22
          %s1961 = ssub.s32 32768, 32768
          %1962 = vsyncadd %s1951, %s1961
          %s1963 = smul.addr %s1958, 4
          %s1964 = sadd.s32 %s1959, %s1963
          %s1965 = smul.addr %s1964, 128
          %s1966 = scalar_lea.hbm %s1, %s1965
          %s1967 = sshll.u32 %s1954, 4
          %s1968 = int_to_ptr.vmem [resolvable:$true] %s1967
          %1973 = dma.vmem_to_hbm [thread:$0]  %s1968, 32768, %s1966, %s1951, 512, 512, 32
        $region32: #{tpu_custom_call.1} parent=23 // pred_fallthru
          _
      $region24: #{tpu_custom_call.1} parent=5 // pred_fallthru
        _
      %p1974 = scmp.le.s32.totalorder 2, %s13
      // Predicated region
      $region33: #{tpu_custom_call.1} parent=5 // pred_check
        %p1975 = pneg %p1974
      $region34: #{tpu_custom_call.1} parent=5 // pred_check_branch
        %1977 = sbr.rel (%p1975) target = $region36
      $region35: #{tpu_custom_call.1} parent=5 // pred_region
        %s1978 = ssub.s32 %s13, 2
        // Predicated region
        $region37: #{tpu_custom_call.1} parent=35 // pred_check
          %p1979 = pneg %p84
        $region38: #{tpu_custom_call.1} parent=35 // pred_check_branch
          %1981 = sbr.rel (%p1979) target = $region40
        $region39: #{tpu_custom_call.1} parent=35 // pred_region
          %s1982 = sand.u32 %s69, 1
          %s1983 = scalar_lea.sflag [#allocation4], %s1982
          %s1984 = sand.u32 %s69, 1
          %s1985 = smul.addr %s1984, 2048
          %s1986 = scalar_lea.vmem [#allocation5], %s1985
          %1987 = dma.done %s1983, 32768
        $region40: #{tpu_custom_call.1} parent=35 // pred_fallthru
          _
      $region36: #{tpu_custom_call.1} parent=5 // pred_fallthru
        _
    $region6: #{tpu_custom_call.1} parent=1 // loop_footer
      %s17 = sadd.s32 1, %s13
    $region7: #{tpu_custom_call.1} parent=1 // loop_footer_branch
      %12 = sbr.rel target = $region3
    $region8: #{tpu_custom_call.1} parent=1 // loop_exit
      _
    %1988 = vsyncpa [#allocation3], 1
    %s1989 = scalar_lea.sflag [#allocation3], 1
    %1990 = vsyncpa %s1989, 1
    %1991 = vsyncpa [#allocation4], 1
    %s1992 = scalar_lea.sflag [#allocation4], 1
    %1993 = vsyncpa %s1992, 1

</llo_original>
